<compile_context>
chip_gen: v7x
topology: tpu7x:2x2x1
jax: 0.10.0
libtpu: 0.0.40
codegen_flags: <defaults>
</compile_context>

<pallas_src>
import jax
import jax.numpy as jnp
from jax.experimental import pallas as pl
from jax.experimental.pallas import tpu as pltpu

F_DIM = 64
USER_VOCAB = 11576 + 1
URL_VOCAB = 4732 + 1


def model6pre_kernel(user_idx_ref, url_idx_ref,        # scalar-prefetch indices (SMEM), (B,)
                     user_tab_ref, url_tab_ref,        # embedding tables, left in HBM (pl.ANY)
                     w_ref, b_ref,                     # linear params (VMEM)
                     out_ref,                          # output tile (TB, 2) (VMEM)
                     ufeat_ref, lfeat_ref, dma_sems):  # scratch: (TB,F_DIM) VMEM x2, DMA sems (2,)
    TB = out_ref.shape[0]
    base = pl.program_id(0) * TB

    # --- Row gather: issue all 2*TB row DMAs HBM -> VMEM (all in flight). ---
    # TB is small and static, so a fully-unrolled loop keeps every scratch
    # index static; only the table row offset is dynamic (clamped in wrapper).
    for j in range(TB):
        u = user_idx_ref[base + j]
        l = url_idx_ref[base + j]
        pltpu.make_async_copy(user_tab_ref.at[pl.ds(u, 1), :],
                              ufeat_ref.at[pl.ds(j, 1), :],
                              dma_sems.at[0]).start()
        pltpu.make_async_copy(url_tab_ref.at[pl.ds(l, 1), :],
                              lfeat_ref.at[pl.ds(j, 1), :],
                              dma_sems.at[1]).start()

    # One wait pass: shared per-table semaphore, per-row-sized wait amounts
    # (matches the per-row increments exactly, independent of DMA granule).
    for j in range(TB):
        pltpu.make_async_copy(user_tab_ref.at[pl.ds(0, 1), :],
                              ufeat_ref.at[pl.ds(j, 1), :],
                              dma_sems.at[0]).wait()
        pltpu.make_async_copy(url_tab_ref.at[pl.ds(0, 1), :],
                              lfeat_ref.at[pl.ds(j, 1), :],
                              dma_sems.at[1]).wait()

    # --- linear_out: one lane-dense (TB, 128) tile, one dot, full W. ---
    feat = jnp.concatenate([ufeat_ref[...], lfeat_ref[...]], axis=1)   # (TB, 2*F_DIM)
    logits = jnp.dot(feat, w_ref[...], preferred_element_type=jnp.float32) + b_ref[...]

    # --- torch.softmax(out, dim=1) for 2 classes, closed form (exact). ---
    d = logits[:, 1:2] - logits[:, 0:1]          # (TB, 1)
    p0 = 1.0 / (1.0 + jnp.exp(d))                # = exp(l0) / (exp(l0) + exp(l1))
    out_ref[...] = jnp.concatenate([p0, 1.0 - p0], axis=1).astype(out_ref.dtype)


def model6pre_forward(user_f_list, url_f_list, user_tab, url_tab, w, b, *, block_b=8):
    """user_f_list: [B, 7] int32, url_f_list: [B, 5] int32 -> [B, 2] float32."""
    B = user_f_list.shape[0]
    TB = min(block_b, B)
    assert B % TB == 0, "batch must be a multiple of the batch tile"

    # if_easy=True: only the first feature column is used. Clamp once here
    # (vectorized) so the in-kernel DMA row offsets can never go OOB.
    user_idx = jnp.clip(user_f_list[:, 0].astype(jnp.int32), 0, user_tab.shape[0] - 1)
    url_idx = jnp.clip(url_f_list[:, 0].astype(jnp.int32), 0, url_tab.shape[0] - 1)

    grid_spec = pltpu.PrefetchScalarGridSpec(
        num_scalar_prefetch=2,
        grid=(B // TB,),
        in_specs=[
            pl.BlockSpec(memory_space=pl.ANY),                  # user table stays in HBM
            pl.BlockSpec(memory_space=pl.ANY),                  # url table stays in HBM
            pl.BlockSpec(w.shape, lambda i, u, l: (0, 0)),      # (2*F_DIM, 2) -> VMEM
            pl.BlockSpec(b.shape, lambda i, u, l: (0, 0)),      # (1, 2)       -> VMEM
        ],
        out_specs=pl.BlockSpec((TB, 2), lambda i, u, l: (i, 0)),
        scratch_shapes=[
            pltpu.VMEM((TB, F_DIM), jnp.float32),
            pltpu.VMEM((TB, F_DIM), jnp.float32),
            pltpu.SemaphoreType.DMA((2,)),
        ],
    )

    return pl.pallas_call(
        model6pre_kernel,
        out_shape=jax.ShapeDtypeStruct((B, 2), jnp.float32),
        grid_spec=grid_spec,
        compiler_params=pltpu.CompilerParams(dimension_semantics=("parallel",)),
    )(user_idx, url_idx, user_tab, url_tab, w, b)


def reference_forward(user_f_list, url_f_list, user_tab, url_tab, w, b):
    ue = jnp.take(user_tab, user_f_list[:, 0], axis=0)
    le = jnp.take(url_tab, url_f_list[:, 0], axis=0)
    feat = jnp.concatenate([ue, le], axis=1)
    logits = feat @ w + b
    return jax.nn.softmax(logits, axis=1)


if __name__ == "__main__":
    key = jax.random.PRNGKey(0)
    k_uidx, k_lidx, k_utab, k_ltab, k_w = jax.random.split(key, 5)

    B = 8  # small batch
    # Feature-index inputs (only column 0 is consumed, matching if_easy=True).
    user_f_list = jax.random.randint(k_uidx, (B, 7), 0, USER_VOCAB, dtype=jnp.int32)
    url_f_list = jax.random.randint(k_lidx, (B, 5), 0, URL_VOCAB, dtype=jnp.int32)

    # Deterministic synthetic parameters (shapes from the module __init__).
    # FeatureEmbed with a single vocab == one embedding table of width F_DIM.
    # TODO(synk): embedding dropout (p=0.1) is identity in eval mode and is omitted.
    user_tab = 0.1 * jax.random.normal(k_utab, (USER_VOCAB, F_DIM), dtype=jnp.float32)
    url_tab = 0.1 * jax.random.normal(k_ltab, (URL_VOCAB, F_DIM), dtype=jnp.float32)
    # nn.Linear(2*F_DIM, 2): weight stored transposed as (2*F_DIM, 2), bias (1, 2).
    w = 0.05 * jax.random.normal(k_w, (2 * F_DIM, 2), dtype=jnp.float32)
    b = jnp.zeros((1, 2), dtype=jnp.float32)

    out = model6pre_forward(user_f_list, url_f_list, user_tab, url_tab, w, b)
    out = jax.block_until_ready(out)

    ref = reference_forward(user_f_list, url_f_list, user_tab, url_tab, w, b)
    assert out.shape == (B, 2)
    assert jnp.allclose(out, ref, atol=1e-5, rtol=1e-5), "mismatch vs. reference"

    print("KERNEL_OK")
</pallas_src>

<mosaic_0001>
module attributes {stable_mosaic.version = 11 : i64} {
  func.func @model6pre_kernel(%arg0: i32, %arg1: memref<8xi32, #tpu.memory_space<smem>>, %arg2: memref<8xi32, #tpu.memory_space<smem>>, %arg3: memref<11577x64xf32, #tpu.memory_space<any>>, %arg4: memref<4733x64xf32, #tpu.memory_space<any>>, %arg5: memref<128x2xf32, #tpu.memory_space<vmem>>, %arg6: memref<1x2xf32, #tpu.memory_space<vmem>>, %arg7: memref<8x2xf32, #tpu.memory_space<vmem>>, %arg8: memref<8x64xf32, #tpu.memory_space<vmem>>, %arg9: memref<8x64xf32, #tpu.memory_space<vmem>>, %arg10: memref<2x!tpu.dma_semaphore, #tpu.memory_space<semaphore_mem>>) attributes {dimension_semantics = [#tpu.dimension_semantics<parallel>], iteration_bounds = array<i64: 1>, scalar_prefetch = 2 : i64, scratch_operands = 3 : i64, tpu.core_type = #tpu.core_type<tc>, window_params = [{}, {}, {pipeline_mode = #tpu.pipeline_mode<synchronous>, transform_indices = @transform_2, window_bounds = array<i64: 128, 2>}, {pipeline_mode = #tpu.pipeline_mode<synchronous>, transform_indices = @transform_3, window_bounds = array<i64: 1, 2>}, {transform_indices = @transform_4, window_bounds = array<i64: 8, 2>}]} {
    %c8_i32 = arith.constant 8 : i32
    %0 = arith.muli %arg0, %c8_i32 : i32
    %c0_i32 = arith.constant 0 : i32
    %1 = arith.addi %0, %c0_i32 : i32
    %2 = arith.index_cast %1 : i32 to index
    %3 = memref.load %arg1[%2] : memref<8xi32, #tpu.memory_space<smem>>
    %c0_i32_0 = arith.constant 0 : i32
    %4 = arith.addi %0, %c0_i32_0 : i32
    %5 = arith.index_cast %4 : i32 to index
    %6 = memref.load %arg2[%5] : memref<8xi32, #tpu.memory_space<smem>>
    %c0_i32_1 = arith.constant 0 : i32
    %c0_i32_2 = arith.constant 0 : i32
    %7 = tpu.memref_slice %arg3[%3, %c0_i32_2] : memref<11577x64xf32, #tpu.memory_space<any>> -> memref<1x64xf32, #tpu.memory_space<any>>
    %c0_i32_3 = arith.constant 0 : i32
    %c0_i32_4 = arith.constant 0 : i32
    %8 = tpu.memref_slice %arg8[%c0_i32_3, %c0_i32_4] : memref<8x64xf32, #tpu.memory_space<vmem>> -> memref<1x64xf32, #tpu.memory_space<vmem>>
    %9 = tpu.memref_slice %arg10[%c0_i32_1] : memref<2x!tpu.dma_semaphore, #tpu.memory_space<semaphore_mem>> -> memref<1x!tpu.dma_semaphore, #tpu.memory_space<semaphore_mem>>
    %10 = tpu.memref_squeeze %9 : memref<1x!tpu.dma_semaphore, #tpu.memory_space<semaphore_mem>> -> memref<!tpu.dma_semaphore, #tpu.memory_space<semaphore_mem>>
    tpu.enqueue_dma source(%7 : memref<1x64xf32, #tpu.memory_space<any>>) target(%8 : memref<1x64xf32, #tpu.memory_space<vmem>>) target_semaphore(%10 : memref<!tpu.dma_semaphore, #tpu.memory_space<semaphore_mem>>)
    %c1_i32 = arith.constant 1 : i32
    %c0_i32_5 = arith.constant 0 : i32
    %11 = tpu.memref_slice %arg4[%6, %c0_i32_5] : memref<4733x64xf32, #tpu.memory_space<any>> -> memref<1x64xf32, #tpu.memory_space<any>>
    %c0_i32_6 = arith.constant 0 : i32
    %c0_i32_7 = arith.constant 0 : i32
    %12 = tpu.memref_slice %arg9[%c0_i32_6, %c0_i32_7] : memref<8x64xf32, #tpu.memory_space<vmem>> -> memref<1x64xf32, #tpu.memory_space<vmem>>
    %13 = tpu.memref_slice %arg10[%c1_i32] : memref<2x!tpu.dma_semaphore, #tpu.memory_space<semaphore_mem>> -> memref<1x!tpu.dma_semaphore, #tpu.memory_space<semaphore_mem>>
    %14 = tpu.memref_squeeze %13 : memref<1x!tpu.dma_semaphore, #tpu.memory_space<semaphore_mem>> -> memref<!tpu.dma_semaphore, #tpu.memory_space<semaphore_mem>>
    tpu.enqueue_dma source(%11 : memref<1x64xf32, #tpu.memory_space<any>>) target(%12 : memref<1x64xf32, #tpu.memory_space<vmem>>) target_semaphore(%14 : memref<!tpu.dma_semaphore, #tpu.memory_space<semaphore_mem>>)
    %c1_i32_8 = arith.constant 1 : i32
    %15 = arith.addi %0, %c1_i32_8 : i32
    %16 = arith.index_cast %15 : i32 to index
    %17 = memref.load %arg1[%16] : memref<8xi32, #tpu.memory_space<smem>>
    %c1_i32_9 = arith.constant 1 : i32
    %18 = arith.addi %0, %c1_i32_9 : i32
    %19 = arith.index_cast %18 : i32 to index
    %20 = memref.load %arg2[%19] : memref<8xi32, #tpu.memory_space<smem>>
    %c0_i32_10 = arith.constant 0 : i32
    %c0_i32_11 = arith.constant 0 : i32
    %21 = tpu.memref_slice %arg3[%17, %c0_i32_11] : memref<11577x64xf32, #tpu.memory_space<any>> -> memref<1x64xf32, #tpu.memory_space<any>>
    %c1_i32_12 = arith.constant 1 : i32
    %c0_i32_13 = arith.constant 0 : i32
    %22 = tpu.memref_slice %arg8[%c1_i32_12, %c0_i32_13] : memref<8x64xf32, #tpu.memory_space<vmem>> -> memref<1x64xf32, #tpu.memory_space<vmem>>
    %23 = tpu.memref_slice %arg10[%c0_i32_10] : memref<2x!tpu.dma_semaphore, #tpu.memory_space<semaphore_mem>> -> memref<1x!tpu.dma_semaphore, #tpu.memory_space<semaphore_mem>>
    %24 = tpu.memref_squeeze %23 : memref<1x!tpu.dma_semaphore, #tpu.memory_space<semaphore_mem>> -> memref<!tpu.dma_semaphore, #tpu.memory_space<semaphore_mem>>
    tpu.enqueue_dma source(%21 : memref<1x64xf32, #tpu.memory_space<any>>) target(%22 : memref<1x64xf32, #tpu.memory_space<vmem>>) target_semaphore(%24 : memref<!tpu.dma_semaphore, #tpu.memory_space<semaphore_mem>>)
    %c1_i32_14 = arith.constant 1 : i32
    %c0_i32_15 = arith.constant 0 : i32
    %25 = tpu.memref_slice %arg4[%20, %c0_i32_15] : memref<4733x64xf32, #tpu.memory_space<any>> -> memref<1x64xf32, #tpu.memory_space<any>>
    %c1_i32_16 = arith.constant 1 : i32
    %c0_i32_17 = arith.constant 0 : i32
    %26 = tpu.memref_slice %arg9[%c1_i32_16, %c0_i32_17] : memref<8x64xf32, #tpu.memory_space<vmem>> -> memref<1x64xf32, #tpu.memory_space<vmem>>
    %27 = tpu.memref_slice %arg10[%c1_i32_14] : memref<2x!tpu.dma_semaphore, #tpu.memory_space<semaphore_mem>> -> memref<1x!tpu.dma_semaphore, #tpu.memory_space<semaphore_mem>>
    %28 = tpu.memref_squeeze %27 : memref<1x!tpu.dma_semaphore, #tpu.memory_space<semaphore_mem>> -> memref<!tpu.dma_semaphore, #tpu.memory_space<semaphore_mem>>
    tpu.enqueue_dma source(%25 : memref<1x64xf32, #tpu.memory_space<any>>) target(%26 : memref<1x64xf32, #tpu.memory_space<vmem>>) target_semaphore(%28 : memref<!tpu.dma_semaphore, #tpu.memory_space<semaphore_mem>>)
    %c2_i32 = arith.constant 2 : i32
    %29 = arith.addi %0, %c2_i32 : i32
    %30 = arith.index_cast %29 : i32 to index
    %31 = memref.load %arg1[%30] : memref<8xi32, #tpu.memory_space<smem>>
    %c2_i32_18 = arith.constant 2 : i32
    %32 = arith.addi %0, %c2_i32_18 : i32
    %33 = arith.index_cast %32 : i32 to index
    %34 = memref.load %arg2[%33] : memref<8xi32, #tpu.memory_space<smem>>
    %c0_i32_19 = arith.constant 0 : i32
    %c0_i32_20 = arith.constant 0 : i32
    %35 = tpu.memref_slice %arg3[%31, %c0_i32_20] : memref<11577x64xf32, #tpu.memory_space<any>> -> memref<1x64xf32, #tpu.memory_space<any>>
    %c2_i32_21 = arith.constant 2 : i32
    %c0_i32_22 = arith.constant 0 : i32
    %36 = tpu.memref_slice %arg8[%c2_i32_21, %c0_i32_22] : memref<8x64xf32, #tpu.memory_space<vmem>> -> memref<1x64xf32, #tpu.memory_space<vmem>>
    %37 = tpu.memref_slice %arg10[%c0_i32_19] : memref<2x!tpu.dma_semaphore, #tpu.memory_space<semaphore_mem>> -> memref<1x!tpu.dma_semaphore, #tpu.memory_space<semaphore_mem>>
    %38 = tpu.memref_squeeze %37 : memref<1x!tpu.dma_semaphore, #tpu.memory_space<semaphore_mem>> -> memref<!tpu.dma_semaphore, #tpu.memory_space<semaphore_mem>>
    tpu.enqueue_dma source(%35 : memref<1x64xf32, #tpu.memory_space<any>>) target(%36 : memref<1x64xf32, #tpu.memory_space<vmem>>) target_semaphore(%38 : memref<!tpu.dma_semaphore, #tpu.memory_space<semaphore_mem>>)
    %c1_i32_23 = arith.constant 1 : i32
    %c0_i32_24 = arith.constant 0 : i32
    %39 = tpu.memref_slice %arg4[%34, %c0_i32_24] : memref<4733x64xf32, #tpu.memory_space<any>> -> memref<1x64xf32, #tpu.memory_space<any>>
    %c2_i32_25 = arith.constant 2 : i32
    %c0_i32_26 = arith.constant 0 : i32
    %40 = tpu.memref_slice %arg9[%c2_i32_25, %c0_i32_26] : memref<8x64xf32, #tpu.memory_space<vmem>> -> memref<1x64xf32, #tpu.memory_space<vmem>>
    %41 = tpu.memref_slice %arg10[%c1_i32_23] : memref<2x!tpu.dma_semaphore, #tpu.memory_space<semaphore_mem>> -> memref<1x!tpu.dma_semaphore, #tpu.memory_space<semaphore_mem>>
    %42 = tpu.memref_squeeze %41 : memref<1x!tpu.dma_semaphore, #tpu.memory_space<semaphore_mem>> -> memref<!tpu.dma_semaphore, #tpu.memory_space<semaphore_mem>>
    tpu.enqueue_dma source(%39 : memref<1x64xf32, #tpu.memory_space<any>>) target(%40 : memref<1x64xf32, #tpu.memory_space<vmem>>) target_semaphore(%42 : memref<!tpu.dma_semaphore, #tpu.memory_space<semaphore_mem>>)
    %c3_i32 = arith.constant 3 : i32
    %43 = arith.addi %0, %c3_i32 : i32
    %44 = arith.index_cast %43 : i32 to index
    %45 = memref.load %arg1[%44] : memref<8xi32, #tpu.memory_space<smem>>
    %c3_i32_27 = arith.constant 3 : i32
    %46 = arith.addi %0, %c3_i32_27 : i32
    %47 = arith.index_cast %46 : i32 to index
    %48 = memref.load %arg2[%47] : memref<8xi32, #tpu.memory_space<smem>>
    %c0_i32_28 = arith.constant 0 : i32
    %c0_i32_29 = arith.constant 0 : i32
    %49 = tpu.memref_slice %arg3[%45, %c0_i32_29] : memref<11577x64xf32, #tpu.memory_space<any>> -> memref<1x64xf32, #tpu.memory_space<any>>
    %c3_i32_30 = arith.constant 3 : i32
    %c0_i32_31 = arith.constant 0 : i32
    %50 = tpu.memref_slice %arg8[%c3_i32_30, %c0_i32_31] : memref<8x64xf32, #tpu.memory_space<vmem>> -> memref<1x64xf32, #tpu.memory_space<vmem>>
    %51 = tpu.memref_slice %arg10[%c0_i32_28] : memref<2x!tpu.dma_semaphore, #tpu.memory_space<semaphore_mem>> -> memref<1x!tpu.dma_semaphore, #tpu.memory_space<semaphore_mem>>
    %52 = tpu.memref_squeeze %51 : memref<1x!tpu.dma_semaphore, #tpu.memory_space<semaphore_mem>> -> memref<!tpu.dma_semaphore, #tpu.memory_space<semaphore_mem>>
    tpu.enqueue_dma source(%49 : memref<1x64xf32, #tpu.memory_space<any>>) target(%50 : memref<1x64xf32, #tpu.memory_space<vmem>>) target_semaphore(%52 : memref<!tpu.dma_semaphore, #tpu.memory_space<semaphore_mem>>)
    %c1_i32_32 = arith.constant 1 : i32
    %c0_i32_33 = arith.constant 0 : i32
    %53 = tpu.memref_slice %arg4[%48, %c0_i32_33] : memref<4733x64xf32, #tpu.memory_space<any>> -> memref<1x64xf32, #tpu.memory_space<any>>
    %c3_i32_34 = arith.constant 3 : i32
    %c0_i32_35 = arith.constant 0 : i32
    %54 = tpu.memref_slice %arg9[%c3_i32_34, %c0_i32_35] : memref<8x64xf32, #tpu.memory_space<vmem>> -> memref<1x64xf32, #tpu.memory_space<vmem>>
    %55 = tpu.memref_slice %arg10[%c1_i32_32] : memref<2x!tpu.dma_semaphore, #tpu.memory_space<semaphore_mem>> -> memref<1x!tpu.dma_semaphore, #tpu.memory_space<semaphore_mem>>
    %56 = tpu.memref_squeeze %55 : memref<1x!tpu.dma_semaphore, #tpu.memory_space<semaphore_mem>> -> memref<!tpu.dma_semaphore, #tpu.memory_space<semaphore_mem>>
    tpu.enqueue_dma source(%53 : memref<1x64xf32, #tpu.memory_space<any>>) target(%54 : memref<1x64xf32, #tpu.memory_space<vmem>>) target_semaphore(%56 : memref<!tpu.dma_semaphore, #tpu.memory_space<semaphore_mem>>)
    %c4_i32 = arith.constant 4 : i32
    %57 = arith.addi %0, %c4_i32 : i32
    %58 = arith.index_cast %57 : i32 to index
    %59 = memref.load %arg1[%58] : memref<8xi32, #tpu.memory_space<smem>>
    %c4_i32_36 = arith.constant 4 : i32
    %60 = arith.addi %0, %c4_i32_36 : i32
    %61 = arith.index_cast %60 : i32 to index
    %62 = memref.load %arg2[%61] : memref<8xi32, #tpu.memory_space<smem>>
    %c0_i32_37 = arith.constant 0 : i32
    %c0_i32_38 = arith.constant 0 : i32
    %63 = tpu.memref_slice %arg3[%59, %c0_i32_38] : memref<11577x64xf32, #tpu.memory_space<any>> -> memref<1x64xf32, #tpu.memory_space<any>>
    %c4_i32_39 = arith.constant 4 : i32
    %c0_i32_40 = arith.constant 0 : i32
    %64 = tpu.memref_slice %arg8[%c4_i32_39, %c0_i32_40] : memref<8x64xf32, #tpu.memory_space<vmem>> -> memref<1x64xf32, #tpu.memory_space<vmem>>
    %65 = tpu.memref_slice %arg10[%c0_i32_37] : memref<2x!tpu.dma_semaphore, #tpu.memory_space<semaphore_mem>> -> memref<1x!tpu.dma_semaphore, #tpu.memory_space<semaphore_mem>>
    %66 = tpu.memref_squeeze %65 : memref<1x!tpu.dma_semaphore, #tpu.memory_space<semaphore_mem>> -> memref<!tpu.dma_semaphore, #tpu.memory_space<semaphore_mem>>
    tpu.enqueue_dma source(%63 : memref<1x64xf32, #tpu.memory_space<any>>) target(%64 : memref<1x64xf32, #tpu.memory_space<vmem>>) target_semaphore(%66 : memref<!tpu.dma_semaphore, #tpu.memory_space<semaphore_mem>>)
    %c1_i32_41 = arith.constant 1 : i32
    %c0_i32_42 = arith.constant 0 : i32
    %67 = tpu.memref_slice %arg4[%62, %c0_i32_42] : memref<4733x64xf32, #tpu.memory_space<any>> -> memref<1x64xf32, #tpu.memory_space<any>>
    %c4_i32_43 = arith.constant 4 : i32
    %c0_i32_44 = arith.constant 0 : i32
    %68 = tpu.memref_slice %arg9[%c4_i32_43, %c0_i32_44] : memref<8x64xf32, #tpu.memory_space<vmem>> -> memref<1x64xf32, #tpu.memory_space<vmem>>
    %69 = tpu.memref_slice %arg10[%c1_i32_41] : memref<2x!tpu.dma_semaphore, #tpu.memory_space<semaphore_mem>> -> memref<1x!tpu.dma_semaphore, #tpu.memory_space<semaphore_mem>>
    %70 = tpu.memref_squeeze %69 : memref<1x!tpu.dma_semaphore, #tpu.memory_space<semaphore_mem>> -> memref<!tpu.dma_semaphore, #tpu.memory_space<semaphore_mem>>
    tpu.enqueue_dma source(%67 : memref<1x64xf32, #tpu.memory_space<any>>) target(%68 : memref<1x64xf32, #tpu.memory_space<vmem>>) target_semaphore(%70 : memref<!tpu.dma_semaphore, #tpu.memory_space<semaphore_mem>>)
    %c5_i32 = arith.constant 5 : i32
    %71 = arith.addi %0, %c5_i32 : i32
    %72 = arith.index_cast %71 : i32 to index
    %73 = memref.load %arg1[%72] : memref<8xi32, #tpu.memory_space<smem>>
    %c5_i32_45 = arith.constant 5 : i32
    %74 = arith.addi %0, %c5_i32_45 : i32
    %75 = arith.index_cast %74 : i32 to index
    %76 = memref.load %arg2[%75] : memref<8xi32, #tpu.memory_space<smem>>
    %c0_i32_46 = arith.constant 0 : i32
    %c0_i32_47 = arith.constant 0 : i32
    %77 = tpu.memref_slice %arg3[%73, %c0_i32_47] : memref<11577x64xf32, #tpu.memory_space<any>> -> memref<1x64xf32, #tpu.memory_space<any>>
    %c5_i32_48 = arith.constant 5 : i32
    %c0_i32_49 = arith.constant 0 : i32
    %78 = tpu.memref_slice %arg8[%c5_i32_48, %c0_i32_49] : memref<8x64xf32, #tpu.memory_space<vmem>> -> memref<1x64xf32, #tpu.memory_space<vmem>>
    %79 = tpu.memref_slice %arg10[%c0_i32_46] : memref<2x!tpu.dma_semaphore, #tpu.memory_space<semaphore_mem>> -> memref<1x!tpu.dma_semaphore, #tpu.memory_space<semaphore_mem>>
    %80 = tpu.memref_squeeze %79 : memref<1x!tpu.dma_semaphore, #tpu.memory_space<semaphore_mem>> -> memref<!tpu.dma_semaphore, #tpu.memory_space<semaphore_mem>>
    tpu.enqueue_dma source(%77 : memref<1x64xf32, #tpu.memory_space<any>>) target(%78 : memref<1x64xf32, #tpu.memory_space<vmem>>) target_semaphore(%80 : memref<!tpu.dma_semaphore, #tpu.memory_space<semaphore_mem>>)
    %c1_i32_50 = arith.constant 1 : i32
    %c0_i32_51 = arith.constant 0 : i32
    %81 = tpu.memref_slice %arg4[%76, %c0_i32_51] : memref<4733x64xf32, #tpu.memory_space<any>> -> memref<1x64xf32, #tpu.memory_space<any>>
    %c5_i32_52 = arith.constant 5 : i32
    %c0_i32_53 = arith.constant 0 : i32
    %82 = tpu.memref_slice %arg9[%c5_i32_52, %c0_i32_53] : memref<8x64xf32, #tpu.memory_space<vmem>> -> memref<1x64xf32, #tpu.memory_space<vmem>>
    %83 = tpu.memref_slice %arg10[%c1_i32_50] : memref<2x!tpu.dma_semaphore, #tpu.memory_space<semaphore_mem>> -> memref<1x!tpu.dma_semaphore, #tpu.memory_space<semaphore_mem>>
    %84 = tpu.memref_squeeze %83 : memref<1x!tpu.dma_semaphore, #tpu.memory_space<semaphore_mem>> -> memref<!tpu.dma_semaphore, #tpu.memory_space<semaphore_mem>>
    tpu.enqueue_dma source(%81 : memref<1x64xf32, #tpu.memory_space<any>>) target(%82 : memref<1x64xf32, #tpu.memory_space<vmem>>) target_semaphore(%84 : memref<!tpu.dma_semaphore, #tpu.memory_space<semaphore_mem>>)
    %c6_i32 = arith.constant 6 : i32
    %85 = arith.addi %0, %c6_i32 : i32
    %86 = arith.index_cast %85 : i32 to index
    %87 = memref.load %arg1[%86] : memref<8xi32, #tpu.memory_space<smem>>
    %c6_i32_54 = arith.constant 6 : i32
    %88 = arith.addi %0, %c6_i32_54 : i32
    %89 = arith.index_cast %88 : i32 to index
    %90 = memref.load %arg2[%89] : memref<8xi32, #tpu.memory_space<smem>>
    %c0_i32_55 = arith.constant 0 : i32
    %c0_i32_56 = arith.constant 0 : i32
    %91 = tpu.memref_slice %arg3[%87, %c0_i32_56] : memref<11577x64xf32, #tpu.memory_space<any>> -> memref<1x64xf32, #tpu.memory_space<any>>
    %c6_i32_57 = arith.constant 6 : i32
    %c0_i32_58 = arith.constant 0 : i32
    %92 = tpu.memref_slice %arg8[%c6_i32_57, %c0_i32_58] : memref<8x64xf32, #tpu.memory_space<vmem>> -> memref<1x64xf32, #tpu.memory_space<vmem>>
    %93 = tpu.memref_slice %arg10[%c0_i32_55] : memref<2x!tpu.dma_semaphore, #tpu.memory_space<semaphore_mem>> -> memref<1x!tpu.dma_semaphore, #tpu.memory_space<semaphore_mem>>
    %94 = tpu.memref_squeeze %93 : memref<1x!tpu.dma_semaphore, #tpu.memory_space<semaphore_mem>> -> memref<!tpu.dma_semaphore, #tpu.memory_space<semaphore_mem>>
    tpu.enqueue_dma source(%91 : memref<1x64xf32, #tpu.memory_space<any>>) target(%92 : memref<1x64xf32, #tpu.memory_space<vmem>>) target_semaphore(%94 : memref<!tpu.dma_semaphore, #tpu.memory_space<semaphore_mem>>)
    %c1_i32_59 = arith.constant 1 : i32
    %c0_i32_60 = arith.constant 0 : i32
    %95 = tpu.memref_slice %arg4[%90, %c0_i32_60] : memref<4733x64xf32, #tpu.memory_space<any>> -> memref<1x64xf32, #tpu.memory_space<any>>
    %c6_i32_61 = arith.constant 6 : i32
    %c0_i32_62 = arith.constant 0 : i32
    %96 = tpu.memref_slice %arg9[%c6_i32_61, %c0_i32_62] : memref<8x64xf32, #tpu.memory_space<vmem>> -> memref<1x64xf32, #tpu.memory_space<vmem>>
    %97 = tpu.memref_slice %arg10[%c1_i32_59] : memref<2x!tpu.dma_semaphore, #tpu.memory_space<semaphore_mem>> -> memref<1x!tpu.dma_semaphore, #tpu.memory_space<semaphore_mem>>
    %98 = tpu.memref_squeeze %97 : memref<1x!tpu.dma_semaphore, #tpu.memory_space<semaphore_mem>> -> memref<!tpu.dma_semaphore, #tpu.memory_space<semaphore_mem>>
    tpu.enqueue_dma source(%95 : memref<1x64xf32, #tpu.memory_space<any>>) target(%96 : memref<1x64xf32, #tpu.memory_space<vmem>>) target_semaphore(%98 : memref<!tpu.dma_semaphore, #tpu.memory_space<semaphore_mem>>)
    %c7_i32 = arith.constant 7 : i32
    %99 = arith.addi %0, %c7_i32 : i32
    %100 = arith.index_cast %99 : i32 to index
    %101 = memref.load %arg1[%100] : memref<8xi32, #tpu.memory_space<smem>>
    %c7_i32_63 = arith.constant 7 : i32
    %102 = arith.addi %0, %c7_i32_63 : i32
    %103 = arith.index_cast %102 : i32 to index
    %104 = memref.load %arg2[%103] : memref<8xi32, #tpu.memory_space<smem>>
    %c0_i32_64 = arith.constant 0 : i32
    %c0_i32_65 = arith.constant 0 : i32
    %105 = tpu.memref_slice %arg3[%101, %c0_i32_65] : memref<11577x64xf32, #tpu.memory_space<any>> -> memref<1x64xf32, #tpu.memory_space<any>>
    %c7_i32_66 = arith.constant 7 : i32
    %c0_i32_67 = arith.constant 0 : i32
    %106 = tpu.memref_slice %arg8[%c7_i32_66, %c0_i32_67] : memref<8x64xf32, #tpu.memory_space<vmem>> -> memref<1x64xf32, #tpu.memory_space<vmem>>
    %107 = tpu.memref_slice %arg10[%c0_i32_64] : memref<2x!tpu.dma_semaphore, #tpu.memory_space<semaphore_mem>> -> memref<1x!tpu.dma_semaphore, #tpu.memory_space<semaphore_mem>>
    %108 = tpu.memref_squeeze %107 : memref<1x!tpu.dma_semaphore, #tpu.memory_space<semaphore_mem>> -> memref<!tpu.dma_semaphore, #tpu.memory_space<semaphore_mem>>
    tpu.enqueue_dma source(%105 : memref<1x64xf32, #tpu.memory_space<any>>) target(%106 : memref<1x64xf32, #tpu.memory_space<vmem>>) target_semaphore(%108 : memref<!tpu.dma_semaphore, #tpu.memory_space<semaphore_mem>>)
    %c1_i32_68 = arith.constant 1 : i32
    %c0_i32_69 = arith.constant 0 : i32
    %109 = tpu.memref_slice %arg4[%104, %c0_i32_69] : memref<4733x64xf32, #tpu.memory_space<any>> -> memref<1x64xf32, #tpu.memory_space<any>>
    %c7_i32_70 = arith.constant 7 : i32
    %c0_i32_71 = arith.constant 0 : i32
    %110 = tpu.memref_slice %arg9[%c7_i32_70, %c0_i32_71] : memref<8x64xf32, #tpu.memory_space<vmem>> -> memref<1x64xf32, #tpu.memory_space<vmem>>
    %111 = tpu.memref_slice %arg10[%c1_i32_68] : memref<2x!tpu.dma_semaphore, #tpu.memory_space<semaphore_mem>> -> memref<1x!tpu.dma_semaphore, #tpu.memory_space<semaphore_mem>>
    %112 = tpu.memref_squeeze %111 : memref<1x!tpu.dma_semaphore, #tpu.memory_space<semaphore_mem>> -> memref<!tpu.dma_semaphore, #tpu.memory_space<semaphore_mem>>
    tpu.enqueue_dma source(%109 : memref<1x64xf32, #tpu.memory_space<any>>) target(%110 : memref<1x64xf32, #tpu.memory_space<vmem>>) target_semaphore(%112 : memref<!tpu.dma_semaphore, #tpu.memory_space<semaphore_mem>>)
    %c0_i32_72 = arith.constant 0 : i32
    %c0_i32_73 = arith.constant 0 : i32
    %c0_i32_74 = arith.constant 0 : i32
    %113 = tpu.memref_slice %arg3[%c0_i32_73, %c0_i32_74] : memref<11577x64xf32, #tpu.memory_space<any>> -> memref<1x64xf32, #tpu.memory_space<any>>
    %c0_i32_75 = arith.constant 0 : i32
    %c0_i32_76 = arith.constant 0 : i32
    %114 = tpu.memref_slice %arg8[%c0_i32_75, %c0_i32_76] : memref<8x64xf32, #tpu.memory_space<vmem>> -> memref<1x64xf32, #tpu.memory_space<vmem>>
    %115 = tpu.memref_slice %arg10[%c0_i32_72] : memref<2x!tpu.dma_semaphore, #tpu.memory_space<semaphore_mem>> -> memref<1x!tpu.dma_semaphore, #tpu.memory_space<semaphore_mem>>
    %116 = tpu.memref_squeeze %115 : memref<1x!tpu.dma_semaphore, #tpu.memory_space<semaphore_mem>> -> memref<!tpu.dma_semaphore, #tpu.memory_space<semaphore_mem>>
    tpu.wait_dma2 semaphore(%116 : memref<!tpu.dma_semaphore, #tpu.memory_space<semaphore_mem>>) src(%113 : memref<1x64xf32, #tpu.memory_space<any>>) dst(%114 : memref<1x64xf32, #tpu.memory_space<vmem>>)
    %c1_i32_77 = arith.constant 1 : i32
    %c0_i32_78 = arith.constant 0 : i32
    %c0_i32_79 = arith.constant 0 : i32
    %117 = tpu.memref_slice %arg4[%c0_i32_78, %c0_i32_79] : memref<4733x64xf32, #tpu.memory_space<any>> -> memref<1x64xf32, #tpu.memory_space<any>>
    %c0_i32_80 = arith.constant 0 : i32
    %c0_i32_81 = arith.constant 0 : i32
    %118 = tpu.memref_slice %arg9[%c0_i32_80, %c0_i32_81] : memref<8x64xf32, #tpu.memory_space<vmem>> -> memref<1x64xf32, #tpu.memory_space<vmem>>
    %119 = tpu.memref_slice %arg10[%c1_i32_77] : memref<2x!tpu.dma_semaphore, #tpu.memory_space<semaphore_mem>> -> memref<1x!tpu.dma_semaphore, #tpu.memory_space<semaphore_mem>>
    %120 = tpu.memref_squeeze %119 : memref<1x!tpu.dma_semaphore, #tpu.memory_space<semaphore_mem>> -> memref<!tpu.dma_semaphore, #tpu.memory_space<semaphore_mem>>
    tpu.wait_dma2 semaphore(%120 : memref<!tpu.dma_semaphore, #tpu.memory_space<semaphore_mem>>) src(%117 : memref<1x64xf32, #tpu.memory_space<any>>) dst(%118 : memref<1x64xf32, #tpu.memory_space<vmem>>)
    %c0_i32_82 = arith.constant 0 : i32
    %c0_i32_83 = arith.constant 0 : i32
    %c0_i32_84 = arith.constant 0 : i32
    %121 = tpu.memref_slice %arg3[%c0_i32_83, %c0_i32_84] : memref<11577x64xf32, #tpu.memory_space<any>> -> memref<1x64xf32, #tpu.memory_space<any>>
    %c1_i32_85 = arith.constant 1 : i32
    %c0_i32_86 = arith.constant 0 : i32
    %122 = tpu.memref_slice %arg8[%c1_i32_85, %c0_i32_86] : memref<8x64xf32, #tpu.memory_space<vmem>> -> memref<1x64xf32, #tpu.memory_space<vmem>>
    %123 = tpu.memref_slice %arg10[%c0_i32_82] : memref<2x!tpu.dma_semaphore, #tpu.memory_space<semaphore_mem>> -> memref<1x!tpu.dma_semaphore, #tpu.memory_space<semaphore_mem>>
    %124 = tpu.memref_squeeze %123 : memref<1x!tpu.dma_semaphore, #tpu.memory_space<semaphore_mem>> -> memref<!tpu.dma_semaphore, #tpu.memory_space<semaphore_mem>>
    tpu.wait_dma2 semaphore(%124 : memref<!tpu.dma_semaphore, #tpu.memory_space<semaphore_mem>>) src(%121 : memref<1x64xf32, #tpu.memory_space<any>>) dst(%122 : memref<1x64xf32, #tpu.memory_space<vmem>>)
    %c1_i32_87 = arith.constant 1 : i32
    %c0_i32_88 = arith.constant 0 : i32
    %c0_i32_89 = arith.constant 0 : i32
    %125 = tpu.memref_slice %arg4[%c0_i32_88, %c0_i32_89] : memref<4733x64xf32, #tpu.memory_space<any>> -> memref<1x64xf32, #tpu.memory_space<any>>
    %c1_i32_90 = arith.constant 1 : i32
    %c0_i32_91 = arith.constant 0 : i32
    %126 = tpu.memref_slice %arg9[%c1_i32_90, %c0_i32_91] : memref<8x64xf32, #tpu.memory_space<vmem>> -> memref<1x64xf32, #tpu.memory_space<vmem>>
    %127 = tpu.memref_slice %arg10[%c1_i32_87] : memref<2x!tpu.dma_semaphore, #tpu.memory_space<semaphore_mem>> -> memref<1x!tpu.dma_semaphore, #tpu.memory_space<semaphore_mem>>
    %128 = tpu.memref_squeeze %127 : memref<1x!tpu.dma_semaphore, #tpu.memory_space<semaphore_mem>> -> memref<!tpu.dma_semaphore, #tpu.memory_space<semaphore_mem>>
    tpu.wait_dma2 semaphore(%128 : memref<!tpu.dma_semaphore, #tpu.memory_space<semaphore_mem>>) src(%125 : memref<1x64xf32, #tpu.memory_space<any>>) dst(%126 : memref<1x64xf32, #tpu.memory_space<vmem>>)
    %c0_i32_92 = arith.constant 0 : i32
    %c0_i32_93 = arith.constant 0 : i32
    %c0_i32_94 = arith.constant 0 : i32
    %129 = tpu.memref_slice %arg3[%c0_i32_93, %c0_i32_94] : memref<11577x64xf32, #tpu.memory_space<any>> -> memref<1x64xf32, #tpu.memory_space<any>>
    %c2_i32_95 = arith.constant 2 : i32
    %c0_i32_96 = arith.constant 0 : i32
    %130 = tpu.memref_slice %arg8[%c2_i32_95, %c0_i32_96] : memref<8x64xf32, #tpu.memory_space<vmem>> -> memref<1x64xf32, #tpu.memory_space<vmem>>
    %131 = tpu.memref_slice %arg10[%c0_i32_92] : memref<2x!tpu.dma_semaphore, #tpu.memory_space<semaphore_mem>> -> memref<1x!tpu.dma_semaphore, #tpu.memory_space<semaphore_mem>>
    %132 = tpu.memref_squeeze %131 : memref<1x!tpu.dma_semaphore, #tpu.memory_space<semaphore_mem>> -> memref<!tpu.dma_semaphore, #tpu.memory_space<semaphore_mem>>
    tpu.wait_dma2 semaphore(%132 : memref<!tpu.dma_semaphore, #tpu.memory_space<semaphore_mem>>) src(%129 : memref<1x64xf32, #tpu.memory_space<any>>) dst(%130 : memref<1x64xf32, #tpu.memory_space<vmem>>)
    %c1_i32_97 = arith.constant 1 : i32
    %c0_i32_98 = arith.constant 0 : i32
    %c0_i32_99 = arith.constant 0 : i32
    %133 = tpu.memref_slice %arg4[%c0_i32_98, %c0_i32_99] : memref<4733x64xf32, #tpu.memory_space<any>> -> memref<1x64xf32, #tpu.memory_space<any>>
    %c2_i32_100 = arith.constant 2 : i32
    %c0_i32_101 = arith.constant 0 : i32
    %134 = tpu.memref_slice %arg9[%c2_i32_100, %c0_i32_101] : memref<8x64xf32, #tpu.memory_space<vmem>> -> memref<1x64xf32, #tpu.memory_space<vmem>>
    %135 = tpu.memref_slice %arg10[%c1_i32_97] : memref<2x!tpu.dma_semaphore, #tpu.memory_space<semaphore_mem>> -> memref<1x!tpu.dma_semaphore, #tpu.memory_space<semaphore_mem>>
    %136 = tpu.memref_squeeze %135 : memref<1x!tpu.dma_semaphore, #tpu.memory_space<semaphore_mem>> -> memref<!tpu.dma_semaphore, #tpu.memory_space<semaphore_mem>>
    tpu.wait_dma2 semaphore(%136 : memref<!tpu.dma_semaphore, #tpu.memory_space<semaphore_mem>>) src(%133 : memref<1x64xf32, #tpu.memory_space<any>>) dst(%134 : memref<1x64xf32, #tpu.memory_space<vmem>>)
    %c0_i32_102 = arith.constant 0 : i32
    %c0_i32_103 = arith.constant 0 : i32
    %c0_i32_104 = arith.constant 0 : i32
    %137 = tpu.memref_slice %arg3[%c0_i32_103, %c0_i32_104] : memref<11577x64xf32, #tpu.memory_space<any>> -> memref<1x64xf32, #tpu.memory_space<any>>
    %c3_i32_105 = arith.constant 3 : i32
    %c0_i32_106 = arith.constant 0 : i32
    %138 = tpu.memref_slice %arg8[%c3_i32_105, %c0_i32_106] : memref<8x64xf32, #tpu.memory_space<vmem>> -> memref<1x64xf32, #tpu.memory_space<vmem>>
    %139 = tpu.memref_slice %arg10[%c0_i32_102] : memref<2x!tpu.dma_semaphore, #tpu.memory_space<semaphore_mem>> -> memref<1x!tpu.dma_semaphore, #tpu.memory_space<semaphore_mem>>
    %140 = tpu.memref_squeeze %139 : memref<1x!tpu.dma_semaphore, #tpu.memory_space<semaphore_mem>> -> memref<!tpu.dma_semaphore, #tpu.memory_space<semaphore_mem>>
    tpu.wait_dma2 semaphore(%140 : memref<!tpu.dma_semaphore, #tpu.memory_space<semaphore_mem>>) src(%137 : memref<1x64xf32, #tpu.memory_space<any>>) dst(%138 : memref<1x64xf32, #tpu.memory_space<vmem>>)
    %c1_i32_107 = arith.constant 1 : i32
    %c0_i32_108 = arith.constant 0 : i32
    %c0_i32_109 = arith.constant 0 : i32
    %141 = tpu.memref_slice %arg4[%c0_i32_108, %c0_i32_109] : memref<4733x64xf32, #tpu.memory_space<any>> -> memref<1x64xf32, #tpu.memory_space<any>>
    %c3_i32_110 = arith.constant 3 : i32
    %c0_i32_111 = arith.constant 0 : i32
    %142 = tpu.memref_slice %arg9[%c3_i32_110, %c0_i32_111] : memref<8x64xf32, #tpu.memory_space<vmem>> -> memref<1x64xf32, #tpu.memory_space<vmem>>
    %143 = tpu.memref_slice %arg10[%c1_i32_107] : memref<2x!tpu.dma_semaphore, #tpu.memory_space<semaphore_mem>> -> memref<1x!tpu.dma_semaphore, #tpu.memory_space<semaphore_mem>>
    %144 = tpu.memref_squeeze %143 : memref<1x!tpu.dma_semaphore, #tpu.memory_space<semaphore_mem>> -> memref<!tpu.dma_semaphore, #tpu.memory_space<semaphore_mem>>
    tpu.wait_dma2 semaphore(%144 : memref<!tpu.dma_semaphore, #tpu.memory_space<semaphore_mem>>) src(%141 : memref<1x64xf32, #tpu.memory_space<any>>) dst(%142 : memref<1x64xf32, #tpu.memory_space<vmem>>)
    %c0_i32_112 = arith.constant 0 : i32
    %c0_i32_113 = arith.constant 0 : i32
    %c0_i32_114 = arith.constant 0 : i32
    %145 = tpu.memref_slice %arg3[%c0_i32_113, %c0_i32_114] : memref<11577x64xf32, #tpu.memory_space<any>> -> memref<1x64xf32, #tpu.memory_space<any>>
    %c4_i32_115 = arith.constant 4 : i32
    %c0_i32_116 = arith.constant 0 : i32
    %146 = tpu.memref_slice %arg8[%c4_i32_115, %c0_i32_116] : memref<8x64xf32, #tpu.memory_space<vmem>> -> memref<1x64xf32, #tpu.memory_space<vmem>>
    %147 = tpu.memref_slice %arg10[%c0_i32_112] : memref<2x!tpu.dma_semaphore, #tpu.memory_space<semaphore_mem>> -> memref<1x!tpu.dma_semaphore, #tpu.memory_space<semaphore_mem>>
    %148 = tpu.memref_squeeze %147 : memref<1x!tpu.dma_semaphore, #tpu.memory_space<semaphore_mem>> -> memref<!tpu.dma_semaphore, #tpu.memory_space<semaphore_mem>>
    tpu.wait_dma2 semaphore(%148 : memref<!tpu.dma_semaphore, #tpu.memory_space<semaphore_mem>>) src(%145 : memref<1x64xf32, #tpu.memory_space<any>>) dst(%146 : memref<1x64xf32, #tpu.memory_space<vmem>>)
    %c1_i32_117 = arith.constant 1 : i32
    %c0_i32_118 = arith.constant 0 : i32
    %c0_i32_119 = arith.constant 0 : i32
    %149 = tpu.memref_slice %arg4[%c0_i32_118, %c0_i32_119] : memref<4733x64xf32, #tpu.memory_space<any>> -> memref<1x64xf32, #tpu.memory_space<any>>
    %c4_i32_120 = arith.constant 4 : i32
    %c0_i32_121 = arith.constant 0 : i32
    %150 = tpu.memref_slice %arg9[%c4_i32_120, %c0_i32_121] : memref<8x64xf32, #tpu.memory_space<vmem>> -> memref<1x64xf32, #tpu.memory_space<vmem>>
    %151 = tpu.memref_slice %arg10[%c1_i32_117] : memref<2x!tpu.dma_semaphore, #tpu.memory_space<semaphore_mem>> -> memref<1x!tpu.dma_semaphore, #tpu.memory_space<semaphore_mem>>
    %152 = tpu.memref_squeeze %151 : memref<1x!tpu.dma_semaphore, #tpu.memory_space<semaphore_mem>> -> memref<!tpu.dma_semaphore, #tpu.memory_space<semaphore_mem>>
    tpu.wait_dma2 semaphore(%152 : memref<!tpu.dma_semaphore, #tpu.memory_space<semaphore_mem>>) src(%149 : memref<1x64xf32, #tpu.memory_space<any>>) dst(%150 : memref<1x64xf32, #tpu.memory_space<vmem>>)
    %c0_i32_122 = arith.constant 0 : i32
    %c0_i32_123 = arith.constant 0 : i32
    %c0_i32_124 = arith.constant 0 : i32
    %153 = tpu.memref_slice %arg3[%c0_i32_123, %c0_i32_124] : memref<11577x64xf32, #tpu.memory_space<any>> -> memref<1x64xf32, #tpu.memory_space<any>>
    %c5_i32_125 = arith.constant 5 : i32
    %c0_i32_126 = arith.constant 0 : i32
    %154 = tpu.memref_slice %arg8[%c5_i32_125, %c0_i32_126] : memref<8x64xf32, #tpu.memory_space<vmem>> -> memref<1x64xf32, #tpu.memory_space<vmem>>
    %155 = tpu.memref_slice %arg10[%c0_i32_122] : memref<2x!tpu.dma_semaphore, #tpu.memory_space<semaphore_mem>> -> memref<1x!tpu.dma_semaphore, #tpu.memory_space<semaphore_mem>>
    %156 = tpu.memref_squeeze %155 : memref<1x!tpu.dma_semaphore, #tpu.memory_space<semaphore_mem>> -> memref<!tpu.dma_semaphore, #tpu.memory_space<semaphore_mem>>
    tpu.wait_dma2 semaphore(%156 : memref<!tpu.dma_semaphore, #tpu.memory_space<semaphore_mem>>) src(%153 : memref<1x64xf32, #tpu.memory_space<any>>) dst(%154 : memref<1x64xf32, #tpu.memory_space<vmem>>)
    %c1_i32_127 = arith.constant 1 : i32
    %c0_i32_128 = arith.constant 0 : i32
    %c0_i32_129 = arith.constant 0 : i32
    %157 = tpu.memref_slice %arg4[%c0_i32_128, %c0_i32_129] : memref<4733x64xf32, #tpu.memory_space<any>> -> memref<1x64xf32, #tpu.memory_space<any>>
    %c5_i32_130 = arith.constant 5 : i32
    %c0_i32_131 = arith.constant 0 : i32
    %158 = tpu.memref_slice %arg9[%c5_i32_130, %c0_i32_131] : memref<8x64xf32, #tpu.memory_space<vmem>> -> memref<1x64xf32, #tpu.memory_space<vmem>>
    %159 = tpu.memref_slice %arg10[%c1_i32_127] : memref<2x!tpu.dma_semaphore, #tpu.memory_space<semaphore_mem>> -> memref<1x!tpu.dma_semaphore, #tpu.memory_space<semaphore_mem>>
    %160 = tpu.memref_squeeze %159 : memref<1x!tpu.dma_semaphore, #tpu.memory_space<semaphore_mem>> -> memref<!tpu.dma_semaphore, #tpu.memory_space<semaphore_mem>>
    tpu.wait_dma2 semaphore(%160 : memref<!tpu.dma_semaphore, #tpu.memory_space<semaphore_mem>>) src(%157 : memref<1x64xf32, #tpu.memory_space<any>>) dst(%158 : memref<1x64xf32, #tpu.memory_space<vmem>>)
    %c0_i32_132 = arith.constant 0 : i32
    %c0_i32_133 = arith.constant 0 : i32
    %c0_i32_134 = arith.constant 0 : i32
    %161 = tpu.memref_slice %arg3[%c0_i32_133, %c0_i32_134] : memref<11577x64xf32, #tpu.memory_space<any>> -> memref<1x64xf32, #tpu.memory_space<any>>
    %c6_i32_135 = arith.constant 6 : i32
    %c0_i32_136 = arith.constant 0 : i32
    %162 = tpu.memref_slice %arg8[%c6_i32_135, %c0_i32_136] : memref<8x64xf32, #tpu.memory_space<vmem>> -> memref<1x64xf32, #tpu.memory_space<vmem>>
    %163 = tpu.memref_slice %arg10[%c0_i32_132] : memref<2x!tpu.dma_semaphore, #tpu.memory_space<semaphore_mem>> -> memref<1x!tpu.dma_semaphore, #tpu.memory_space<semaphore_mem>>
    %164 = tpu.memref_squeeze %163 : memref<1x!tpu.dma_semaphore, #tpu.memory_space<semaphore_mem>> -> memref<!tpu.dma_semaphore, #tpu.memory_space<semaphore_mem>>
    tpu.wait_dma2 semaphore(%164 : memref<!tpu.dma_semaphore, #tpu.memory_space<semaphore_mem>>) src(%161 : memref<1x64xf32, #tpu.memory_space<any>>) dst(%162 : memref<1x64xf32, #tpu.memory_space<vmem>>)
    %c1_i32_137 = arith.constant 1 : i32
    %c0_i32_138 = arith.constant 0 : i32
    %c0_i32_139 = arith.constant 0 : i32
    %165 = tpu.memref_slice %arg4[%c0_i32_138, %c0_i32_139] : memref<4733x64xf32, #tpu.memory_space<any>> -> memref<1x64xf32, #tpu.memory_space<any>>
    %c6_i32_140 = arith.constant 6 : i32
    %c0_i32_141 = arith.constant 0 : i32
    %166 = tpu.memref_slice %arg9[%c6_i32_140, %c0_i32_141] : memref<8x64xf32, #tpu.memory_space<vmem>> -> memref<1x64xf32, #tpu.memory_space<vmem>>
    %167 = tpu.memref_slice %arg10[%c1_i32_137] : memref<2x!tpu.dma_semaphore, #tpu.memory_space<semaphore_mem>> -> memref<1x!tpu.dma_semaphore, #tpu.memory_space<semaphore_mem>>
    %168 = tpu.memref_squeeze %167 : memref<1x!tpu.dma_semaphore, #tpu.memory_space<semaphore_mem>> -> memref<!tpu.dma_semaphore, #tpu.memory_space<semaphore_mem>>
    tpu.wait_dma2 semaphore(%168 : memref<!tpu.dma_semaphore, #tpu.memory_space<semaphore_mem>>) src(%165 : memref<1x64xf32, #tpu.memory_space<any>>) dst(%166 : memref<1x64xf32, #tpu.memory_space<vmem>>)
    %c0_i32_142 = arith.constant 0 : i32
    %c0_i32_143 = arith.constant 0 : i32
    %c0_i32_144 = arith.constant 0 : i32
    %169 = tpu.memref_slice %arg3[%c0_i32_143, %c0_i32_144] : memref<11577x64xf32, #tpu.memory_space<any>> -> memref<1x64xf32, #tpu.memory_space<any>>
    %c7_i32_145 = arith.constant 7 : i32
    %c0_i32_146 = arith.constant 0 : i32
    %170 = tpu.memref_slice %arg8[%c7_i32_145, %c0_i32_146] : memref<8x64xf32, #tpu.memory_space<vmem>> -> memref<1x64xf32, #tpu.memory_space<vmem>>
    %171 = tpu.memref_slice %arg10[%c0_i32_142] : memref<2x!tpu.dma_semaphore, #tpu.memory_space<semaphore_mem>> -> memref<1x!tpu.dma_semaphore, #tpu.memory_space<semaphore_mem>>
    %172 = tpu.memref_squeeze %171 : memref<1x!tpu.dma_semaphore, #tpu.memory_space<semaphore_mem>> -> memref<!tpu.dma_semaphore, #tpu.memory_space<semaphore_mem>>
    tpu.wait_dma2 semaphore(%172 : memref<!tpu.dma_semaphore, #tpu.memory_space<semaphore_mem>>) src(%169 : memref<1x64xf32, #tpu.memory_space<any>>) dst(%170 : memref<1x64xf32, #tpu.memory_space<vmem>>)
    %c1_i32_147 = arith.constant 1 : i32
    %c0_i32_148 = arith.constant 0 : i32
    %c0_i32_149 = arith.constant 0 : i32
    %173 = tpu.memref_slice %arg4[%c0_i32_148, %c0_i32_149] : memref<4733x64xf32, #tpu.memory_space<any>> -> memref<1x64xf32, #tpu.memory_space<any>>
    %c7_i32_150 = arith.constant 7 : i32
    %c0_i32_151 = arith.constant 0 : i32
    %174 = tpu.memref_slice %arg9[%c7_i32_150, %c0_i32_151] : memref<8x64xf32, #tpu.memory_space<vmem>> -> memref<1x64xf32, #tpu.memory_space<vmem>>
    %175 = tpu.memref_slice %arg10[%c1_i32_147] : memref<2x!tpu.dma_semaphore, #tpu.memory_space<semaphore_mem>> -> memref<1x!tpu.dma_semaphore, #tpu.memory_space<semaphore_mem>>
    %176 = tpu.memref_squeeze %175 : memref<1x!tpu.dma_semaphore, #tpu.memory_space<semaphore_mem>> -> memref<!tpu.dma_semaphore, #tpu.memory_space<semaphore_mem>>
    tpu.wait_dma2 semaphore(%176 : memref<!tpu.dma_semaphore, #tpu.memory_space<semaphore_mem>>) src(%173 : memref<1x64xf32, #tpu.memory_space<any>>) dst(%174 : memref<1x64xf32, #tpu.memory_space<vmem>>)
    %c0 = arith.constant 0 : index
    %c0_152 = arith.constant 0 : index
    %177 = vector.load %arg8[%c0, %c0_152] : memref<8x64xf32, #tpu.memory_space<vmem>>, vector<8x64xf32>
    %c0_153 = arith.constant 0 : index
    %c0_154 = arith.constant 0 : index
    %178 = vector.load %arg9[%c0_153, %c0_154] : memref<8x64xf32, #tpu.memory_space<vmem>>, vector<8x64xf32>
    %179 = tpu.concatenate %177, %178 in 1 : vector<8x64xf32>, vector<8x64xf32> -> vector<8x128xf32>
    %c0_155 = arith.constant 0 : index
    %c0_156 = arith.constant 0 : index
    %180 = vector.load %arg5[%c0_155, %c0_156] : memref<128x2xf32, #tpu.memory_space<vmem>>, vector<128x2xf32>
    %cst = arith.constant dense<0.000000e+00> : vector<8x2xf32>
    %181 = tpu.matmul %179, %180, %cst {dimension_numbers = #tpu.dot_dimension_numbers<[1], [0], [0], [1], [0, 0, 1, 1], [], []>} : vector<8x128xf32>, vector<128x2xf32>, vector<8x2xf32> -> vector<8x2xf32>
    %c0_157 = arith.constant 0 : index
    %c0_158 = arith.constant 0 : index
    %182 = vector.load %arg6[%c0_157, %c0_158] : memref<1x2xf32, #tpu.memory_space<vmem>>, vector<1x2xf32>
    %183 = vector.broadcast %182 : vector<1x2xf32> to vector<8x2xf32>
    %184 = arith.addf %181, %183 : vector<8x2xf32>
    %185 = vector.extract_strided_slice %184 {offsets = [0, 1], sizes = [8, 1], strides = [1, 1]} : vector<8x2xf32> to vector<8x1xf32>
    %186 = vector.extract_strided_slice %184 {offsets = [0, 0], sizes = [8, 1], strides = [1, 1]} : vector<8x2xf32> to vector<8x1xf32>
    %187 = arith.subf %185, %186 : vector<8x1xf32>
    %188 = math.exp %187 : vector<8x1xf32>
    %cst_159 = arith.constant 1.000000e+00 : f32
    %189 = vector.broadcast %cst_159 : f32 to vector<8x1xf32>
    %190 = arith.addf %189, %188 : vector<8x1xf32>
    %cst_160 = arith.constant 1.000000e+00 : f32
    %191 = vector.broadcast %cst_160 : f32 to vector<8x1xf32>
    %192 = arith.divf %191, %190 : vector<8x1xf32>
    %cst_161 = arith.constant 1.000000e+00 : f32
    %193 = vector.broadcast %cst_161 : f32 to vector<8x1xf32>
    %194 = arith.subf %193, %192 : vector<8x1xf32>
    %195 = tpu.concatenate %192, %194 in 1 : vector<8x1xf32>, vector<8x1xf32> -> vector<8x2xf32>
    %c0_162 = arith.constant 0 : index
    %c0_163 = arith.constant 0 : index
    %196 = vector.load %arg7[%c0_162, %c0_163] : memref<8x2xf32, #tpu.memory_space<vmem>>, vector<8x2xf32>
    tpu.vector_store %arg7[%c0_162, %c0_163], %195 {strides = array<i32>} : memref<8x2xf32, #tpu.memory_space<vmem>>, vector<8x2xf32>,
    return
  }
  func.func @transform_2(%arg0: i32, %arg1: memref<8xi32, #tpu.memory_space<smem>>, %arg2: memref<8xi32, #tpu.memory_space<smem>>) -> (i32, i32) {
    %c0_i32 = arith.constant 0 : i32
    %c0_i32_0 = arith.constant 0 : i32
    %c0_i32_1 = arith.constant 0 : i32
    return %c0_i32, %c0_i32_0 : i32, i32
  }
  func.func @transform_3(%arg0: i32, %arg1: memref<8xi32, #tpu.memory_space<smem>>, %arg2: memref<8xi32, #tpu.memory_space<smem>>) -> (i32, i32) {
    %c0_i32 = arith.constant 0 : i32
    %c0_i32_0 = arith.constant 0 : i32
    %c0_i32_1 = arith.constant 0 : i32
    return %c0_i32, %c0_i32_0 : i32, i32
  }
  func.func @transform_4(%arg0: i32, %arg1: memref<8xi32, #tpu.memory_space<smem>>, %arg2: memref<8xi32, #tpu.memory_space<smem>>) -> (i32, i32) {
    %c0_i32 = arith.constant 0 : i32
    %c0_i32_0 = arith.constant 0 : i32
    return %arg0, %c0_i32 : i32, i32
  }
}

</mosaic_0001>

<llo_original>
// kernel: tpu_custom_call.1
$region0: #{tpu_custom_call.1}
  #allocation0 [shape = 'u32[]', space=smem, size = 0x4, offset = 0x4, fixed_abs, tag = 'smem constant byte address 0x4 - core index']
  #allocation1 [shape = 'u32[144,128]{1,0:T(1,128)}', space=vmem, size = 0x12000, scoped, tag = 'internal scratch']
  #allocation2 [shape = 'f32[8,64]{1,0:T(8,128)}', space=vmem, size = 0x1000, scoped, tag = 'scratch operand']
  #allocation3 [shape = 'f32[8,64]{1,0:T(8,128)}', space=vmem, size = 0x1000, scoped, tag = 'scratch operand']
  #allocation4 [shape = 's32[2]{0}', space=sflag, size = 0x8, scoped, tag = 'scratch operand']
  #allocation5 [shape = 's32[1]{0}', space=sflag, size = 0x4, scoped, tag = 'scoped memory for tpu_custom_call.1']
  #allocation6 [shape = 'u8[512]{0}', space=smem, size = 0x200, scoped, tag = 'prefetched SMEM operand 0']
  #allocation7 [shape = 'u8[512]{0}', space=smem, size = 0x200, scoped, tag = 'prefetched SMEM operand 1']
  #allocation8 [shape = 's32[]', space=sflag, size = 0x4, offset = 0, fixed_abs, tag = 'sflag constant byte address 0x0 - dummy sync flag']
  #allocation9 [shape = 's32[]', space=sflag, size = 0x4, offset = 0, fixed_abs, tag = 'sflag constant byte address 0x0 - dummy sync flag']
  #allocation10 [shape = 's32[]', space=sflag, size = 0x4, offset = 0, fixed_abs, tag = 'sflag constant byte address 0x0 - dummy sync flag']
  #allocation11 [shape = 's32[]', space=sflag, size = 0x4, offset = 0, fixed_abs, tag = 'sflag constant byte address 0x0 - dummy sync flag']
  #allocation12 [shape = 's32[]', space=sflag, size = 0x4, offset = 0, fixed_abs, tag = 'sflag constant byte address 0x0 - dummy sync flag']
  #allocation13 [shape = 's32[]', space=sflag, size = 0x4, offset = 0, fixed_abs, tag = 'sflag constant byte address 0x0 - dummy sync flag']
  #allocation14 [shape = 's32[]', space=sflag, size = 0x4, offset = 0, fixed_abs, tag = 'sflag constant byte address 0x0 - dummy sync flag']
  #allocation15 [shape = 's32[]', space=sflag, size = 0x4, offset = 0, fixed_abs, tag = 'sflag constant byte address 0x0 - dummy sync flag']
  #allocation16 [shape = 's32[]', space=sflag, size = 0x4, offset = 0, fixed_abs, tag = 'sflag constant byte address 0x0 - dummy sync flag']
  #allocation17 [shape = 's32[]', space=sflag, size = 0x4, offset = 0, fixed_abs, tag = 'sflag constant byte address 0x0 - dummy sync flag']
  #allocation18 [shape = 's32[]', space=sflag, size = 0x4, offset = 0, fixed_abs, tag = 'sflag constant byte address 0x0 - dummy sync flag']
  #allocation19 [shape = 's32[]', space=sflag, size = 0x4, offset = 0, fixed_abs, tag = 'sflag constant byte address 0x0 - dummy sync flag']
  #allocation20 [shape = 's32[]', space=sflag, size = 0x4, offset = 0, fixed_abs, tag = 'sflag constant byte address 0x0 - dummy sync flag']
  #allocation21 [shape = 's32[]', space=sflag, size = 0x4, offset = 0, fixed_abs, tag = 'sflag constant byte address 0x0 - dummy sync flag']
  #allocation22 [shape = 's32[]', space=sflag, size = 0x4, offset = 0, fixed_abs, tag = 'sflag constant byte address 0x0 - dummy sync flag']
  #allocation23 [shape = 's32[]', space=sflag, size = 0x4, offset = 0, fixed_abs, tag = 'sflag constant byte address 0x0 - dummy sync flag']
  %s0 = inlined_call_operand.vmem [shape: s32[8], index: 0, kind: input, shape index: {}]
  %s1 = inlined_call_operand.vmem [shape: s32[8], index: 1, kind: input, shape index: {}]
  %s2 = inlined_call_operand.vmem [shape: f32[11577,64], index: 2, kind: input, shape index: {}]
  %s3 = inlined_call_operand.vmem [shape: f32[4733,64], index: 3, kind: input, shape index: {}]
  %s4 = inlined_call_operand.vmem [shape: f32[128,2], index: 4, kind: input, shape index: {}]
  %s5 = inlined_call_operand.vmem [shape: f32[1,2], index: 5, kind: input, shape index: {}]
  %s6 = inlined_call_operand.vmem [shape: f32[8,2], index: 6, kind: output, shape index: {}]
  %s7 = sld [smem:[#allocation0]]
  $region498: #{tpu_custom_call.1} parent=0
    _
  %s9 = ssub.s32 1, %s7
  %s10 = scalar_select 0, %s9, %s7
  %s11 = sshll.u32 %s0, 4
  %s12 = int_to_ptr.vmem [resolvable:$true] %s11
  %14 = dma.vmem_to_smem %s12, 16, [#allocation6], [#allocation5]
  %s15 = sshll.u32 %s1, 4
  %s16 = int_to_ptr.vmem [resolvable:$true] %s15
  %18 = dma.vmem_to_smem %s16, 16, [#allocation7], [#allocation5]
  %19 = dma.done [#allocation5], 32
  %20 = sfence
  // Predicated region
  $region2: #{tpu_custom_call.1} parent=0 // pred_check
    _
  $region3: #{tpu_custom_call.1} parent=0 // pred_check_branch
    %22 = sbr.rel (0) target = $region5
  $region4: #{tpu_custom_call.1} parent=0 // pred_region
    _
  $region5: #{tpu_custom_call.1} parent=0 // pred_fallthru
    _
  // Predicated region
  $region6: #{tpu_custom_call.1} parent=0 // pred_check
    _
  $region7: #{tpu_custom_call.1} parent=0 // pred_check_branch
    %24 = sbr.rel (0) target = $region9
  $region8: #{tpu_custom_call.1} parent=0 // pred_region
    _
  $region9: #{tpu_custom_call.1} parent=0 // pred_fallthru
    _
  %s25 = smul.u32 0, 8
  %s26 = sld [smem:[#allocation6 + %s25]]
  %s27 = sld [smem:[#allocation7 + %s25]]
  %s28 = scalar_lea.vmem %s2, %s26
  %p30 = scmp.lt.u32.totalorder 1, 8
  %p31 = pneg %p30
  // Predicated region
  $region10: #{tpu_custom_call.1} parent=0 // pred_check
    _
  $region11: #{tpu_custom_call.1} parent=0 // pred_check_branch
    %33 = sbr.rel (%p30) target = $region13
  $region12: #{tpu_custom_call.1} parent=0 // pred_region
    %s48 = sand.u32 1, 7
    %p49 = scmp.eq.s32.totalorder %s48, 0
    %p50 = pneg %p49
    // Predicated region
    $region25: #{tpu_custom_call.1} parent=12 // pred_check
      _
    $region26: #{tpu_custom_call.1} parent=12 // pred_check_branch
      %52 = sbr.rel (%p49) target = $region28
    $region27: #{tpu_custom_call.1} parent=12 // pred_region
      %s53 = sand.u32 1, 7
      %s54 = ssub.s32 1, %s53
      %s55 = scalar_lea.vmem %s28, %s54
      %s56 = ssub.s32 1, %s53
      %s57 = scalar_lea.vmem [#allocation2], %s56
      %s58 = sshllo.u32 0, %s53
      loop: start=0, step=1, limit=1
      $region29: #{tpu_custom_call.1} parent=27 // loop_pre_header
        _
      $region30: #{tpu_custom_call.1} parent=27 // loop_header
        %s60 = sphi 0, %s64
        %p61 = scmp.ge.s32.totalorder %s60, 1
        %s65 = sphi %s55, %s55
        %s66 = sphi %s57, %s57
      $region31: #{tpu_custom_call.1} parent=27 // loop_header_branch
        %63 = sbr.rel (%p61) target = $region35
      $region32: #{tpu_custom_call.1} parent=27 // loop_body
        %v67 = vld [vmem:[%s65] sm:%s58]
        %68 = vst [vmem:[%s66] sm:%s58] %v67
      $region33: #{tpu_custom_call.1} parent=27 // loop_footer
        %s64 = sadd.s32 1, %s60
      $region34: #{tpu_custom_call.1} parent=27 // loop_footer_branch
        %59 = sbr.rel target = $region30
      $region35: #{tpu_custom_call.1} parent=27 // loop_exit
        _
    $region28: #{tpu_custom_call.1} parent=12 // pred_fallthru
      _
  $region13: #{tpu_custom_call.1} parent=0 // pred_fallthru
    _
  // Predicated region
  $region14: #{tpu_custom_call.1} parent=0 // pred_check
    %p34 = pneg %p30
  $region15: #{tpu_custom_call.1} parent=0 // pred_check_branch
    %36 = sbr.rel (%p34) target = $region17
  $region16: #{tpu_custom_call.1} parent=0 // pred_region
    %s37 = sshllo.u32 0, 1
    loop: start=0, step=1, limit=1
    $region18: #{tpu_custom_call.1} parent=16 // loop_pre_header
      _
    $region19: #{tpu_custom_call.1} parent=16 // loop_header
      %s39 = sphi 0, %s43
      %p40 = scmp.ge.s32.totalorder %s39, 1
      %s44 = sphi %s28, %s28
      %s45 = sphi [#allocation2], [#allocation2]
    $region20: #{tpu_custom_call.1} parent=16 // loop_header_branch
      %42 = sbr.rel (%p40) target = $region24
    $region21: #{tpu_custom_call.1} parent=16 // loop_body
      %v46 = vld [vmem:[%s44] sm:%s37]
      %47 = vst [vmem:[%s45] sm:%s37] %v46
    $region22: #{tpu_custom_call.1} parent=16 // loop_footer
      %s43 = sadd.s32 1, %s39
    $region23: #{tpu_custom_call.1} parent=16 // loop_footer_branch
      %38 = sbr.rel target = $region19
    $region24: #{tpu_custom_call.1} parent=16 // loop_exit
      _
  $region17: #{tpu_custom_call.1} parent=0 // pred_fallthru
    _
  // Predicated region
  $region36: #{tpu_custom_call.1} parent=0 // pred_check
    _
  $region37: #{tpu_custom_call.1} parent=0 // pred_check_branch
    %71 = sbr.rel (0) target = $region39
  $region38: #{tpu_custom_call.1} parent=0 // pred_region
    %72 = vsyncadd [#allocation4], 16
  $region39: #{tpu_custom_call.1} parent=0 // pred_fallthru
    _
  %s73 = scalar_lea.vmem %s3, %s27
  %s74 = scalar_lea.sflag [#allocation4], 1
  %p76 = scmp.lt.u32.totalorder 1, 8
  %p77 = pneg %p76
  // Predicated region
  $region40: #{tpu_custom_call.1} parent=0 // pred_check
    _
  $region41: #{tpu_custom_call.1} parent=0 // pred_check_branch
    %79 = sbr.rel (%p76) target = $region43
  $region42: #{tpu_custom_call.1} parent=0 // pred_region
    %s94 = sand.u32 1, 7
    %p95 = scmp.eq.s32.totalorder %s94, 0
    %p96 = pneg %p95
    // Predicated region
    $region55: #{tpu_custom_call.1} parent=42 // pred_check
      _
    $region56: #{tpu_custom_call.1} parent=42 // pred_check_branch
      %98 = sbr.rel (%p95) target = $region58
    $region57: #{tpu_custom_call.1} parent=42 // pred_region
      %s99 = sand.u32 1, 7
      %s100 = ssub.s32 1, %s99
      %s101 = scalar_lea.vmem %s73, %s100
      %s102 = ssub.s32 1, %s99
      %s103 = scalar_lea.vmem [#allocation3], %s102
      %s104 = sshllo.u32 0, %s99
      loop: start=0, step=1, limit=1
      $region59: #{tpu_custom_call.1} parent=57 // loop_pre_header
        _
      $region60: #{tpu_custom_call.1} parent=57 // loop_header
        %s106 = sphi 0, %s110
        %p107 = scmp.ge.s32.totalorder %s106, 1
        %s111 = sphi %s101, %s101
        %s112 = sphi %s103, %s103
      $region61: #{tpu_custom_call.1} parent=57 // loop_header_branch
        %109 = sbr.rel (%p107) target = $region65
      $region62: #{tpu_custom_call.1} parent=57 // loop_body
        %v113 = vld [vmem:[%s111] sm:%s104]
        %114 = vst [vmem:[%s112] sm:%s104] %v113
      $region63: #{tpu_custom_call.1} parent=57 // loop_footer
        %s110 = sadd.s32 1, %s106
      $region64: #{tpu_custom_call.1} parent=57 // loop_footer_branch
        %105 = sbr.rel target = $region60
      $region65: #{tpu_custom_call.1} parent=57 // loop_exit
        _
    $region58: #{tpu_custom_call.1} parent=42 // pred_fallthru
      _
  $region43: #{tpu_custom_call.1} parent=0 // pred_fallthru
    _
  // Predicated region
  $region44: #{tpu_custom_call.1} parent=0 // pred_check
    %p80 = pneg %p76
  $region45: #{tpu_custom_call.1} parent=0 // pred_check_branch
    %82 = sbr.rel (%p80) target = $region47
  $region46: #{tpu_custom_call.1} parent=0 // pred_region
    %s83 = sshllo.u32 0, 1
    loop: start=0, step=1, limit=1
    $region48: #{tpu_custom_call.1} parent=46 // loop_pre_header
      _
    $region49: #{tpu_custom_call.1} parent=46 // loop_header
      %s85 = sphi 0, %s89
      %p86 = scmp.ge.s32.totalorder %s85, 1
      %s90 = sphi %s73, %s73
      %s91 = sphi [#allocation3], [#allocation3]
    $region50: #{tpu_custom_call.1} parent=46 // loop_header_branch
      %88 = sbr.rel (%p86) target = $region54
    $region51: #{tpu_custom_call.1} parent=46 // loop_body
      %v92 = vld [vmem:[%s90] sm:%s83]
      %93 = vst [vmem:[%s91] sm:%s83] %v92
    $region52: #{tpu_custom_call.1} parent=46 // loop_footer
      %s89 = sadd.s32 1, %s85
    $region53: #{tpu_custom_call.1} parent=46 // loop_footer_branch
      %84 = sbr.rel target = $region49
    $region54: #{tpu_custom_call.1} parent=46 // loop_exit
      _
  $region47: #{tpu_custom_call.1} parent=0 // pred_fallthru
    _
  // Predicated region
  $region66: #{tpu_custom_call.1} parent=0 // pred_check
    _
  $region67: #{tpu_custom_call.1} parent=0 // pred_check_branch
    %117 = sbr.rel (0) target = $region69
  $region68: #{tpu_custom_call.1} parent=0 // pred_region
    %118 = vsyncadd %s74, 16
  $region69: #{tpu_custom_call.1} parent=0 // pred_fallthru
    _
  %s119 = sadd.s32 %s25, 1
  %s120 = sld [smem:[#allocation6 + %s119]]
  %s121 = sld [smem:[#allocation7 + %s119]]
  %s122 = scalar_lea.vmem %s2, %s120
  %s123 = scalar_lea.vmem [#allocation2], 1
  %p125 = scmp.lt.u32.totalorder 1, 8
  %p126 = pneg %p125
  // Predicated region
  $region70: #{tpu_custom_call.1} parent=0 // pred_check
    _
  $region71: #{tpu_custom_call.1} parent=0 // pred_check_branch
    %128 = sbr.rel (%p125) target = $region73
  $region72: #{tpu_custom_call.1} parent=0 // pred_region
    %s143 = sand.u32 1, 7
    %p144 = scmp.eq.s32.totalorder %s143, 0
    %p145 = pneg %p144
    // Predicated region
    $region85: #{tpu_custom_call.1} parent=72 // pred_check
      _
    $region86: #{tpu_custom_call.1} parent=72 // pred_check_branch
      %147 = sbr.rel (%p144) target = $region88
    $region87: #{tpu_custom_call.1} parent=72 // pred_region
      %s148 = sand.u32 1, 7
      %s149 = ssub.s32 1, %s148
      %s150 = scalar_lea.vmem %s122, %s149
      %s151 = ssub.s32 1, %s148
      %s152 = scalar_lea.vmem %s123, %s151 [#allocation2]
      %s153 = sshllo.u32 0, %s148
      loop: start=0, step=1, limit=1
      $region89: #{tpu_custom_call.1} parent=87 // loop_pre_header
        _
      $region90: #{tpu_custom_call.1} parent=87 // loop_header
        %s155 = sphi 0, %s159
        %p156 = scmp.ge.s32.totalorder %s155, 1
        %s160 = sphi %s150, %s150
        %s161 = sphi %s152, %s152
      $region91: #{tpu_custom_call.1} parent=87 // loop_header_branch
        %158 = sbr.rel (%p156) target = $region95
      $region92: #{tpu_custom_call.1} parent=87 // loop_body
        %v162 = vld [vmem:[%s160] sm:%s153]
        %163 = vst [vmem:[%s161] sm:%s153] %v162
      $region93: #{tpu_custom_call.1} parent=87 // loop_footer
        %s159 = sadd.s32 1, %s155
      $region94: #{tpu_custom_call.1} parent=87 // loop_footer_branch
        %154 = sbr.rel target = $region90
      $region95: #{tpu_custom_call.1} parent=87 // loop_exit
        _
    $region88: #{tpu_custom_call.1} parent=72 // pred_fallthru
      _
  $region73: #{tpu_custom_call.1} parent=0 // pred_fallthru
    _
  // Predicated region
  $region74: #{tpu_custom_call.1} parent=0 // pred_check
    %p129 = pneg %p125
  $region75: #{tpu_custom_call.1} parent=0 // pred_check_branch
    %131 = sbr.rel (%p129) target = $region77
  $region76: #{tpu_custom_call.1} parent=0 // pred_region
    %s132 = sshllo.u32 0, 1
    loop: start=0, step=1, limit=1
    $region78: #{tpu_custom_call.1} parent=76 // loop_pre_header
      _
    $region79: #{tpu_custom_call.1} parent=76 // loop_header
      %s134 = sphi 0, %s138
      %p135 = scmp.ge.s32.totalorder %s134, 1
      %s139 = sphi %s122, %s122
      %s140 = sphi %s123, %s123
    $region80: #{tpu_custom_call.1} parent=76 // loop_header_branch
      %137 = sbr.rel (%p135) target = $region84
    $region81: #{tpu_custom_call.1} parent=76 // loop_body
      %v141 = vld [vmem:[%s139] sm:%s132]
      %142 = vst [vmem:[%s140] sm:%s132] %v141
    $region82: #{tpu_custom_call.1} parent=76 // loop_footer
      %s138 = sadd.s32 1, %s134
    $region83: #{tpu_custom_call.1} parent=76 // loop_footer_branch
      %133 = sbr.rel target = $region79
    $region84: #{tpu_custom_call.1} parent=76 // loop_exit
      _
  $region77: #{tpu_custom_call.1} parent=0 // pred_fallthru
    _
  // Predicated region
  $region96: #{tpu_custom_call.1} parent=0 // pred_check
    _
  $region97: #{tpu_custom_call.1} parent=0 // pred_check_branch
    %166 = sbr.rel (0) target = $region99
  $region98: #{tpu_custom_call.1} parent=0 // pred_region
    %167 = vsyncadd [#allocation4], 16
  $region99: #{tpu_custom_call.1} parent=0 // pred_fallthru
    _
  %s168 = scalar_lea.vmem %s3, %s121
  %s169 = scalar_lea.vmem [#allocation3], 1
  %p171 = scmp.lt.u32.totalorder 1, 8
  %p172 = pneg %p171
  // Predicated region
  $region100: #{tpu_custom_call.1} parent=0 // pred_check
    _
  $region101: #{tpu_custom_call.1} parent=0 // pred_check_branch
    %174 = sbr.rel (%p171) target = $region103
  $region102: #{tpu_custom_call.1} parent=0 // pred_region
    %s189 = sand.u32 1, 7
    %p190 = scmp.eq.s32.totalorder %s189, 0
    %p191 = pneg %p190
    // Predicated region
    $region115: #{tpu_custom_call.1} parent=102 // pred_check
      _
    $region116: #{tpu_custom_call.1} parent=102 // pred_check_branch
      %193 = sbr.rel (%p190) target = $region118
    $region117: #{tpu_custom_call.1} parent=102 // pred_region
      %s194 = sand.u32 1, 7
      %s195 = ssub.s32 1, %s194
      %s196 = scalar_lea.vmem %s168, %s195
      %s197 = ssub.s32 1, %s194
      %s198 = scalar_lea.vmem %s169, %s197 [#allocation3]
      %s199 = sshllo.u32 0, %s194
      loop: start=0, step=1, limit=1
      $region119: #{tpu_custom_call.1} parent=117 // loop_pre_header
        _
      $region120: #{tpu_custom_call.1} parent=117 // loop_header
        %s201 = sphi 0, %s205
        %p202 = scmp.ge.s32.totalorder %s201, 1
        %s206 = sphi %s196, %s196
        %s207 = sphi %s198, %s198
      $region121: #{tpu_custom_call.1} parent=117 // loop_header_branch
        %204 = sbr.rel (%p202) target = $region125
      $region122: #{tpu_custom_call.1} parent=117 // loop_body
        %v208 = vld [vmem:[%s206] sm:%s199]
        %209 = vst [vmem:[%s207] sm:%s199] %v208
      $region123: #{tpu_custom_call.1} parent=117 // loop_footer
        %s205 = sadd.s32 1, %s201
      $region124: #{tpu_custom_call.1} parent=117 // loop_footer_branch
        %200 = sbr.rel target = $region120
      $region125: #{tpu_custom_call.1} parent=117 // loop_exit
        _
    $region118: #{tpu_custom_call.1} parent=102 // pred_fallthru
      _
  $region103: #{tpu_custom_call.1} parent=0 // pred_fallthru
    _
  // Predicated region
  $region104: #{tpu_custom_call.1} parent=0 // pred_check
    %p175 = pneg %p171
  $region105: #{tpu_custom_call.1} parent=0 // pred_check_branch
    %177 = sbr.rel (%p175) target = $region107
  $region106: #{tpu_custom_call.1} parent=0 // pred_region
    %s178 = sshllo.u32 0, 1
    loop: start=0, step=1, limit=1
    $region108: #{tpu_custom_call.1} parent=106 // loop_pre_header
      _
    $region109: #{tpu_custom_call.1} parent=106 // loop_header
      %s180 = sphi 0, %s184
      %p181 = scmp.ge.s32.totalorder %s180, 1
      %s185 = sphi %s168, %s168
      %s186 = sphi %s169, %s169
    $region110: #{tpu_custom_call.1} parent=106 // loop_header_branch
      %183 = sbr.rel (%p181) target = $region114
    $region111: #{tpu_custom_call.1} parent=106 // loop_body
      %v187 = vld [vmem:[%s185] sm:%s178]
      %188 = vst [vmem:[%s186] sm:%s178] %v187
    $region112: #{tpu_custom_call.1} parent=106 // loop_footer
      %s184 = sadd.s32 1, %s180
    $region113: #{tpu_custom_call.1} parent=106 // loop_footer_branch
      %179 = sbr.rel target = $region109
    $region114: #{tpu_custom_call.1} parent=106 // loop_exit
      _
  $region107: #{tpu_custom_call.1} parent=0 // pred_fallthru
    _
  // Predicated region
  $region126: #{tpu_custom_call.1} parent=0 // pred_check
    _
  $region127: #{tpu_custom_call.1} parent=0 // pred_check_branch
    %212 = sbr.rel (0) target = $region129
  $region128: #{tpu_custom_call.1} parent=0 // pred_region
    %213 = vsyncadd %s74, 16
  $region129: #{tpu_custom_call.1} parent=0 // pred_fallthru
    _
  %s214 = sadd.s32 %s25, 2
  %s215 = sld [smem:[#allocation6 + %s214]]
  %s216 = sld [smem:[#allocation7 + %s214]]
  %s217 = scalar_lea.vmem %s2, %s215
  %s218 = scalar_lea.vmem [#allocation2], 2
  %p220 = scmp.lt.u32.totalorder 1, 8
  %p221 = pneg %p220
  // Predicated region
  $region130: #{tpu_custom_call.1} parent=0 // pred_check
    _
  $region131: #{tpu_custom_call.1} parent=0 // pred_check_branch
    %223 = sbr.rel (%p220) target = $region133
  $region132: #{tpu_custom_call.1} parent=0 // pred_region
    %s238 = sand.u32 1, 7
    %p239 = scmp.eq.s32.totalorder %s238, 0
    %p240 = pneg %p239
    // Predicated region
    $region145: #{tpu_custom_call.1} parent=132 // pred_check
      _
    $region146: #{tpu_custom_call.1} parent=132 // pred_check_branch
      %242 = sbr.rel (%p239) target = $region148
    $region147: #{tpu_custom_call.1} parent=132 // pred_region
      %s243 = sand.u32 1, 7
      %s244 = ssub.s32 1, %s243
      %s245 = scalar_lea.vmem %s217, %s244
      %s246 = ssub.s32 1, %s243
      %s247 = scalar_lea.vmem %s218, %s246 [#allocation2]
      %s248 = sshllo.u32 0, %s243
      loop: start=0, step=1, limit=1
      $region149: #{tpu_custom_call.1} parent=147 // loop_pre_header
        _
      $region150: #{tpu_custom_call.1} parent=147 // loop_header
        %s250 = sphi 0, %s254
        %p251 = scmp.ge.s32.totalorder %s250, 1
        %s255 = sphi %s245, %s245
        %s256 = sphi %s247, %s247
      $region151: #{tpu_custom_call.1} parent=147 // loop_header_branch
        %253 = sbr.rel (%p251) target = $region155
      $region152: #{tpu_custom_call.1} parent=147 // loop_body
        %v257 = vld [vmem:[%s255] sm:%s248]
        %258 = vst [vmem:[%s256] sm:%s248] %v257
      $region153: #{tpu_custom_call.1} parent=147 // loop_footer
        %s254 = sadd.s32 1, %s250
      $region154: #{tpu_custom_call.1} parent=147 // loop_footer_branch
        %249 = sbr.rel target = $region150
      $region155: #{tpu_custom_call.1} parent=147 // loop_exit
        _
    $region148: #{tpu_custom_call.1} parent=132 // pred_fallthru
      _
  $region133: #{tpu_custom_call.1} parent=0 // pred_fallthru
    _
  // Predicated region
  $region134: #{tpu_custom_call.1} parent=0 // pred_check
    %p224 = pneg %p220
  $region135: #{tpu_custom_call.1} parent=0 // pred_check_branch
    %226 = sbr.rel (%p224) target = $region137
  $region136: #{tpu_custom_call.1} parent=0 // pred_region
    %s227 = sshllo.u32 0, 1
    loop: start=0, step=1, limit=1
    $region138: #{tpu_custom_call.1} parent=136 // loop_pre_header
      _
    $region139: #{tpu_custom_call.1} parent=136 // loop_header
      %s229 = sphi 0, %s233
      %p230 = scmp.ge.s32.totalorder %s229, 1
      %s234 = sphi %s217, %s217
      %s235 = sphi %s218, %s218
    $region140: #{tpu_custom_call.1} parent=136 // loop_header_branch
      %232 = sbr.rel (%p230) target = $region144
    $region141: #{tpu_custom_call.1} parent=136 // loop_body
      %v236 = vld [vmem:[%s234] sm:%s227]
      %237 = vst [vmem:[%s235] sm:%s227] %v236
    $region142: #{tpu_custom_call.1} parent=136 // loop_footer
      %s233 = sadd.s32 1, %s229
    $region143: #{tpu_custom_call.1} parent=136 // loop_footer_branch
      %228 = sbr.rel target = $region139
    $region144: #{tpu_custom_call.1} parent=136 // loop_exit
      _
  $region137: #{tpu_custom_call.1} parent=0 // pred_fallthru
    _
  // Predicated region
  $region156: #{tpu_custom_call.1} parent=0 // pred_check
    _
  $region157: #{tpu_custom_call.1} parent=0 // pred_check_branch
    %261 = sbr.rel (0) target = $region159
  $region158: #{tpu_custom_call.1} parent=0 // pred_region
    %262 = vsyncadd [#allocation4], 16
  $region159: #{tpu_custom_call.1} parent=0 // pred_fallthru
    _
  %s263 = scalar_lea.vmem %s3, %s216
  %s264 = scalar_lea.vmem [#allocation3], 2
  %p266 = scmp.lt.u32.totalorder 1, 8
  %p267 = pneg %p266
  // Predicated region
  $region160: #{tpu_custom_call.1} parent=0 // pred_check
    _
  $region161: #{tpu_custom_call.1} parent=0 // pred_check_branch
    %269 = sbr.rel (%p266) target = $region163
  $region162: #{tpu_custom_call.1} parent=0 // pred_region
    %s284 = sand.u32 1, 7
    %p285 = scmp.eq.s32.totalorder %s284, 0
    %p286 = pneg %p285
    // Predicated region
    $region175: #{tpu_custom_call.1} parent=162 // pred_check
      _
    $region176: #{tpu_custom_call.1} parent=162 // pred_check_branch
      %288 = sbr.rel (%p285) target = $region178
    $region177: #{tpu_custom_call.1} parent=162 // pred_region
      %s289 = sand.u32 1, 7
      %s290 = ssub.s32 1, %s289
      %s291 = scalar_lea.vmem %s263, %s290
      %s292 = ssub.s32 1, %s289
      %s293 = scalar_lea.vmem %s264, %s292 [#allocation3]
      %s294 = sshllo.u32 0, %s289
      loop: start=0, step=1, limit=1
      $region179: #{tpu_custom_call.1} parent=177 // loop_pre_header
        _
      $region180: #{tpu_custom_call.1} parent=177 // loop_header
        %s296 = sphi 0, %s300
        %p297 = scmp.ge.s32.totalorder %s296, 1
        %s301 = sphi %s291, %s291
        %s302 = sphi %s293, %s293
      $region181: #{tpu_custom_call.1} parent=177 // loop_header_branch
        %299 = sbr.rel (%p297) target = $region185
      $region182: #{tpu_custom_call.1} parent=177 // loop_body
        %v303 = vld [vmem:[%s301] sm:%s294]
        %304 = vst [vmem:[%s302] sm:%s294] %v303
      $region183: #{tpu_custom_call.1} parent=177 // loop_footer
        %s300 = sadd.s32 1, %s296
      $region184: #{tpu_custom_call.1} parent=177 // loop_footer_branch
        %295 = sbr.rel target = $region180
      $region185: #{tpu_custom_call.1} parent=177 // loop_exit
        _
    $region178: #{tpu_custom_call.1} parent=162 // pred_fallthru
      _
  $region163: #{tpu_custom_call.1} parent=0 // pred_fallthru
    _
  // Predicated region
  $region164: #{tpu_custom_call.1} parent=0 // pred_check
    %p270 = pneg %p266
  $region165: #{tpu_custom_call.1} parent=0 // pred_check_branch
    %272 = sbr.rel (%p270) target = $region167
  $region166: #{tpu_custom_call.1} parent=0 // pred_region
    %s273 = sshllo.u32 0, 1
    loop: start=0, step=1, limit=1
    $region168: #{tpu_custom_call.1} parent=166 // loop_pre_header
      _
    $region169: #{tpu_custom_call.1} parent=166 // loop_header
      %s275 = sphi 0, %s279
      %p276 = scmp.ge.s32.totalorder %s275, 1
      %s280 = sphi %s263, %s263
      %s281 = sphi %s264, %s264
    $region170: #{tpu_custom_call.1} parent=166 // loop_header_branch
      %278 = sbr.rel (%p276) target = $region174
    $region171: #{tpu_custom_call.1} parent=166 // loop_body
      %v282 = vld [vmem:[%s280] sm:%s273]
      %283 = vst [vmem:[%s281] sm:%s273] %v282
    $region172: #{tpu_custom_call.1} parent=166 // loop_footer
      %s279 = sadd.s32 1, %s275
    $region173: #{tpu_custom_call.1} parent=166 // loop_footer_branch
      %274 = sbr.rel target = $region169
    $region174: #{tpu_custom_call.1} parent=166 // loop_exit
      _
  $region167: #{tpu_custom_call.1} parent=0 // pred_fallthru
    _
  // Predicated region
  $region186: #{tpu_custom_call.1} parent=0 // pred_check
    _
  $region187: #{tpu_custom_call.1} parent=0 // pred_check_branch
    %307 = sbr.rel (0) target = $region189
  $region188: #{tpu_custom_call.1} parent=0 // pred_region
    %308 = vsyncadd %s74, 16
  $region189: #{tpu_custom_call.1} parent=0 // pred_fallthru
    _
  %s309 = sadd.s32 %s25, 3
  %s310 = sld [smem:[#allocation6 + %s309]]
  %s311 = sld [smem:[#allocation7 + %s309]]
  %s312 = scalar_lea.vmem %s2, %s310
  %s313 = scalar_lea.vmem [#allocation2], 3
  %p315 = scmp.lt.u32.totalorder 1, 8
  %p316 = pneg %p315
  // Predicated region
  $region190: #{tpu_custom_call.1} parent=0 // pred_check
    _
  $region191: #{tpu_custom_call.1} parent=0 // pred_check_branch
    %318 = sbr.rel (%p315) target = $region193
  $region192: #{tpu_custom_call.1} parent=0 // pred_region
    %s333 = sand.u32 1, 7
    %p334 = scmp.eq.s32.totalorder %s333, 0
    %p335 = pneg %p334
    // Predicated region
    $region205: #{tpu_custom_call.1} parent=192 // pred_check
      _
    $region206: #{tpu_custom_call.1} parent=192 // pred_check_branch
      %337 = sbr.rel (%p334) target = $region208
    $region207: #{tpu_custom_call.1} parent=192 // pred_region
      %s338 = sand.u32 1, 7
      %s339 = ssub.s32 1, %s338
      %s340 = scalar_lea.vmem %s312, %s339
      %s341 = ssub.s32 1, %s338
      %s342 = scalar_lea.vmem %s313, %s341 [#allocation2]
      %s343 = sshllo.u32 0, %s338
      loop: start=0, step=1, limit=1
      $region209: #{tpu_custom_call.1} parent=207 // loop_pre_header
        _
      $region210: #{tpu_custom_call.1} parent=207 // loop_header
        %s345 = sphi 0, %s349
        %p346 = scmp.ge.s32.totalorder %s345, 1
        %s350 = sphi %s340, %s340
        %s351 = sphi %s342, %s342
      $region211: #{tpu_custom_call.1} parent=207 // loop_header_branch
        %348 = sbr.rel (%p346) target = $region215
      $region212: #{tpu_custom_call.1} parent=207 // loop_body
        %v352 = vld [vmem:[%s350] sm:%s343]
        %353 = vst [vmem:[%s351] sm:%s343] %v352
      $region213: #{tpu_custom_call.1} parent=207 // loop_footer
        %s349 = sadd.s32 1, %s345
      $region214: #{tpu_custom_call.1} parent=207 // loop_footer_branch
        %344 = sbr.rel target = $region210
      $region215: #{tpu_custom_call.1} parent=207 // loop_exit
        _
    $region208: #{tpu_custom_call.1} parent=192 // pred_fallthru
      _
  $region193: #{tpu_custom_call.1} parent=0 // pred_fallthru
    _
  // Predicated region
  $region194: #{tpu_custom_call.1} parent=0 // pred_check
    %p319 = pneg %p315
  $region195: #{tpu_custom_call.1} parent=0 // pred_check_branch
    %321 = sbr.rel (%p319) target = $region197
  $region196: #{tpu_custom_call.1} parent=0 // pred_region
    %s322 = sshllo.u32 0, 1
    loop: start=0, step=1, limit=1
    $region198: #{tpu_custom_call.1} parent=196 // loop_pre_header
      _
    $region199: #{tpu_custom_call.1} parent=196 // loop_header
      %s324 = sphi 0, %s328
      %p325 = scmp.ge.s32.totalorder %s324, 1
      %s329 = sphi %s312, %s312
      %s330 = sphi %s313, %s313
    $region200: #{tpu_custom_call.1} parent=196 // loop_header_branch
      %327 = sbr.rel (%p325) target = $region204
    $region201: #{tpu_custom_call.1} parent=196 // loop_body
      %v331 = vld [vmem:[%s329] sm:%s322]
      %332 = vst [vmem:[%s330] sm:%s322] %v331
    $region202: #{tpu_custom_call.1} parent=196 // loop_footer
      %s328 = sadd.s32 1, %s324
    $region203: #{tpu_custom_call.1} parent=196 // loop_footer_branch
      %323 = sbr.rel target = $region199
    $region204: #{tpu_custom_call.1} parent=196 // loop_exit
      _
  $region197: #{tpu_custom_call.1} parent=0 // pred_fallthru
    _
  // Predicated region
  $region216: #{tpu_custom_call.1} parent=0 // pred_check
    _
  $region217: #{tpu_custom_call.1} parent=0 // pred_check_branch
    %356 = sbr.rel (0) target = $region219
  $region218: #{tpu_custom_call.1} parent=0 // pred_region
    %357 = vsyncadd [#allocation4], 16
  $region219: #{tpu_custom_call.1} parent=0 // pred_fallthru
    _
  %s358 = scalar_lea.vmem %s3, %s311
  %s359 = scalar_lea.vmem [#allocation3], 3
  %p361 = scmp.lt.u32.totalorder 1, 8
  %p362 = pneg %p361
  // Predicated region
  $region220: #{tpu_custom_call.1} parent=0 // pred_check
    _
  $region221: #{tpu_custom_call.1} parent=0 // pred_check_branch
    %364 = sbr.rel (%p361) target = $region223
  $region222: #{tpu_custom_call.1} parent=0 // pred_region
    %s379 = sand.u32 1, 7
    %p380 = scmp.eq.s32.totalorder %s379, 0
    %p381 = pneg %p380
    // Predicated region
    $region235: #{tpu_custom_call.1} parent=222 // pred_check
      _
    $region236: #{tpu_custom_call.1} parent=222 // pred_check_branch
      %383 = sbr.rel (%p380) target = $region238
    $region237: #{tpu_custom_call.1} parent=222 // pred_region
      %s384 = sand.u32 1, 7
      %s385 = ssub.s32 1, %s384
      %s386 = scalar_lea.vmem %s358, %s385
      %s387 = ssub.s32 1, %s384
      %s388 = scalar_lea.vmem %s359, %s387 [#allocation3]
      %s389 = sshllo.u32 0, %s384
      loop: start=0, step=1, limit=1
      $region239: #{tpu_custom_call.1} parent=237 // loop_pre_header
        _
      $region240: #{tpu_custom_call.1} parent=237 // loop_header
        %s391 = sphi 0, %s395
        %p392 = scmp.ge.s32.totalorder %s391, 1
        %s396 = sphi %s386, %s386
        %s397 = sphi %s388, %s388
      $region241: #{tpu_custom_call.1} parent=237 // loop_header_branch
        %394 = sbr.rel (%p392) target = $region245
      $region242: #{tpu_custom_call.1} parent=237 // loop_body
        %v398 = vld [vmem:[%s396] sm:%s389]
        %399 = vst [vmem:[%s397] sm:%s389] %v398
      $region243: #{tpu_custom_call.1} parent=237 // loop_footer
        %s395 = sadd.s32 1, %s391
      $region244: #{tpu_custom_call.1} parent=237 // loop_footer_branch
        %390 = sbr.rel target = $region240
      $region245: #{tpu_custom_call.1} parent=237 // loop_exit
        _
    $region238: #{tpu_custom_call.1} parent=222 // pred_fallthru
      _
  $region223: #{tpu_custom_call.1} parent=0 // pred_fallthru
    _
  // Predicated region
  $region224: #{tpu_custom_call.1} parent=0 // pred_check
    %p365 = pneg %p361
  $region225: #{tpu_custom_call.1} parent=0 // pred_check_branch
    %367 = sbr.rel (%p365) target = $region227
  $region226: #{tpu_custom_call.1} parent=0 // pred_region
    %s368 = sshllo.u32 0, 1
    loop: start=0, step=1, limit=1
    $region228: #{tpu_custom_call.1} parent=226 // loop_pre_header
      _
    $region229: #{tpu_custom_call.1} parent=226 // loop_header
      %s370 = sphi 0, %s374
      %p371 = scmp.ge.s32.totalorder %s370, 1
      %s375 = sphi %s358, %s358
      %s376 = sphi %s359, %s359
    $region230: #{tpu_custom_call.1} parent=226 // loop_header_branch
      %373 = sbr.rel (%p371) target = $region234
    $region231: #{tpu_custom_call.1} parent=226 // loop_body
      %v377 = vld [vmem:[%s375] sm:%s368]
      %378 = vst [vmem:[%s376] sm:%s368] %v377
    $region232: #{tpu_custom_call.1} parent=226 // loop_footer
      %s374 = sadd.s32 1, %s370
    $region233: #{tpu_custom_call.1} parent=226 // loop_footer_branch
      %369 = sbr.rel target = $region229
    $region234: #{tpu_custom_call.1} parent=226 // loop_exit
      _
  $region227: #{tpu_custom_call.1} parent=0 // pred_fallthru
    _
  // Predicated region
  $region246: #{tpu_custom_call.1} parent=0 // pred_check
    _
  $region247: #{tpu_custom_call.1} parent=0 // pred_check_branch
    %402 = sbr.rel (0) target = $region249
  $region248: #{tpu_custom_call.1} parent=0 // pred_region
    %403 = vsyncadd %s74, 16
  $region249: #{tpu_custom_call.1} parent=0 // pred_fallthru
    _
  %s404 = sadd.s32 %s25, 4
  %s405 = sld [smem:[#allocation6 + %s404]]
  %s406 = sld [smem:[#allocation7 + %s404]]
  %s407 = scalar_lea.vmem %s2, %s405
  %s408 = scalar_lea.vmem [#allocation2], 4
  %p410 = scmp.lt.u32.totalorder 1, 8
  %p411 = pneg %p410
  // Predicated region
  $region250: #{tpu_custom_call.1} parent=0 // pred_check
    _
  $region251: #{tpu_custom_call.1} parent=0 // pred_check_branch
    %413 = sbr.rel (%p410) target = $region253
  $region252: #{tpu_custom_call.1} parent=0 // pred_region
    %s428 = sand.u32 1, 7
    %p429 = scmp.eq.s32.totalorder %s428, 0
    %p430 = pneg %p429
    // Predicated region
    $region265: #{tpu_custom_call.1} parent=252 // pred_check
      _
    $region266: #{tpu_custom_call.1} parent=252 // pred_check_branch
      %432 = sbr.rel (%p429) target = $region268
    $region267: #{tpu_custom_call.1} parent=252 // pred_region
      %s433 = sand.u32 1, 7
      %s434 = ssub.s32 1, %s433
      %s435 = scalar_lea.vmem %s407, %s434
      %s436 = ssub.s32 1, %s433
      %s437 = scalar_lea.vmem %s408, %s436 [#allocation2]
      %s438 = sshllo.u32 0, %s433
      loop: start=0, step=1, limit=1
      $region269: #{tpu_custom_call.1} parent=267 // loop_pre_header
        _
      $region270: #{tpu_custom_call.1} parent=267 // loop_header
        %s440 = sphi 0, %s444
        %p441 = scmp.ge.s32.totalorder %s440, 1
        %s445 = sphi %s435, %s435
        %s446 = sphi %s437, %s437
      $region271: #{tpu_custom_call.1} parent=267 // loop_header_branch
        %443 = sbr.rel (%p441) target = $region275
      $region272: #{tpu_custom_call.1} parent=267 // loop_body
        %v447 = vld [vmem:[%s445] sm:%s438]
        %448 = vst [vmem:[%s446] sm:%s438] %v447
      $region273: #{tpu_custom_call.1} parent=267 // loop_footer
        %s444 = sadd.s32 1, %s440
      $region274: #{tpu_custom_call.1} parent=267 // loop_footer_branch
        %439 = sbr.rel target = $region270
      $region275: #{tpu_custom_call.1} parent=267 // loop_exit
        _
    $region268: #{tpu_custom_call.1} parent=252 // pred_fallthru
      _
  $region253: #{tpu_custom_call.1} parent=0 // pred_fallthru
    _
  // Predicated region
  $region254: #{tpu_custom_call.1} parent=0 // pred_check
    %p414 = pneg %p410
  $region255: #{tpu_custom_call.1} parent=0 // pred_check_branch
    %416 = sbr.rel (%p414) target = $region257
  $region256: #{tpu_custom_call.1} parent=0 // pred_region
    %s417 = sshllo.u32 0, 1
    loop: start=0, step=1, limit=1
    $region258: #{tpu_custom_call.1} parent=256 // loop_pre_header
      _
    $region259: #{tpu_custom_call.1} parent=256 // loop_header
      %s419 = sphi 0, %s423
      %p420 = scmp.ge.s32.totalorder %s419, 1
      %s424 = sphi %s407, %s407
      %s425 = sphi %s408, %s408
    $region260: #{tpu_custom_call.1} parent=256 // loop_header_branch
      %422 = sbr.rel (%p420) target = $region264
    $region261: #{tpu_custom_call.1} parent=256 // loop_body
      %v426 = vld [vmem:[%s424] sm:%s417]
      %427 = vst [vmem:[%s425] sm:%s417] %v426
    $region262: #{tpu_custom_call.1} parent=256 // loop_footer
      %s423 = sadd.s32 1, %s419
    $region263: #{tpu_custom_call.1} parent=256 // loop_footer_branch
      %418 = sbr.rel target = $region259
    $region264: #{tpu_custom_call.1} parent=256 // loop_exit
      _
  $region257: #{tpu_custom_call.1} parent=0 // pred_fallthru
    _
  // Predicated region
  $region276: #{tpu_custom_call.1} parent=0 // pred_check
    _
  $region277: #{tpu_custom_call.1} parent=0 // pred_check_branch
    %451 = sbr.rel (0) target = $region279
  $region278: #{tpu_custom_call.1} parent=0 // pred_region
    %452 = vsyncadd [#allocation4], 16
  $region279: #{tpu_custom_call.1} parent=0 // pred_fallthru
    _
  %s453 = scalar_lea.vmem %s3, %s406
  %s454 = scalar_lea.vmem [#allocation3], 4
  %p456 = scmp.lt.u32.totalorder 1, 8
  %p457 = pneg %p456
  // Predicated region
  $region280: #{tpu_custom_call.1} parent=0 // pred_check
    _
  $region281: #{tpu_custom_call.1} parent=0 // pred_check_branch
    %459 = sbr.rel (%p456) target = $region283
  $region282: #{tpu_custom_call.1} parent=0 // pred_region
    %s474 = sand.u32 1, 7
    %p475 = scmp.eq.s32.totalorder %s474, 0
    %p476 = pneg %p475
    // Predicated region
    $region295: #{tpu_custom_call.1} parent=282 // pred_check
      _
    $region296: #{tpu_custom_call.1} parent=282 // pred_check_branch
      %478 = sbr.rel (%p475) target = $region298
    $region297: #{tpu_custom_call.1} parent=282 // pred_region
      %s479 = sand.u32 1, 7
      %s480 = ssub.s32 1, %s479
      %s481 = scalar_lea.vmem %s453, %s480
      %s482 = ssub.s32 1, %s479
      %s483 = scalar_lea.vmem %s454, %s482 [#allocation3]
      %s484 = sshllo.u32 0, %s479
      loop: start=0, step=1, limit=1
      $region299: #{tpu_custom_call.1} parent=297 // loop_pre_header
        _
      $region300: #{tpu_custom_call.1} parent=297 // loop_header
        %s486 = sphi 0, %s490
        %p487 = scmp.ge.s32.totalorder %s486, 1
        %s491 = sphi %s481, %s481
        %s492 = sphi %s483, %s483
      $region301: #{tpu_custom_call.1} parent=297 // loop_header_branch
        %489 = sbr.rel (%p487) target = $region305
      $region302: #{tpu_custom_call.1} parent=297 // loop_body
        %v493 = vld [vmem:[%s491] sm:%s484]
        %494 = vst [vmem:[%s492] sm:%s484] %v493
      $region303: #{tpu_custom_call.1} parent=297 // loop_footer
        %s490 = sadd.s32 1, %s486
      $region304: #{tpu_custom_call.1} parent=297 // loop_footer_branch
        %485 = sbr.rel target = $region300
      $region305: #{tpu_custom_call.1} parent=297 // loop_exit
        _
    $region298: #{tpu_custom_call.1} parent=282 // pred_fallthru
      _
  $region283: #{tpu_custom_call.1} parent=0 // pred_fallthru
    _
  // Predicated region
  $region284: #{tpu_custom_call.1} parent=0 // pred_check
    %p460 = pneg %p456
  $region285: #{tpu_custom_call.1} parent=0 // pred_check_branch
    %462 = sbr.rel (%p460) target = $region287
  $region286: #{tpu_custom_call.1} parent=0 // pred_region
    %s463 = sshllo.u32 0, 1
    loop: start=0, step=1, limit=1
    $region288: #{tpu_custom_call.1} parent=286 // loop_pre_header
      _
    $region289: #{tpu_custom_call.1} parent=286 // loop_header
      %s465 = sphi 0, %s469
      %p466 = scmp.ge.s32.totalorder %s465, 1
      %s470 = sphi %s453, %s453
      %s471 = sphi %s454, %s454
    $region290: #{tpu_custom_call.1} parent=286 // loop_header_branch
      %468 = sbr.rel (%p466) target = $region294
    $region291: #{tpu_custom_call.1} parent=286 // loop_body
      %v472 = vld [vmem:[%s470] sm:%s463]
      %473 = vst [vmem:[%s471] sm:%s463] %v472
    $region292: #{tpu_custom_call.1} parent=286 // loop_footer
      %s469 = sadd.s32 1, %s465
    $region293: #{tpu_custom_call.1} parent=286 // loop_footer_branch
      %464 = sbr.rel target = $region289
    $region294: #{tpu_custom_call.1} parent=286 // loop_exit
      _
  $region287: #{tpu_custom_call.1} parent=0 // pred_fallthru
    _
  // Predicated region
  $region306: #{tpu_custom_call.1} parent=0 // pred_check
    _
  $region307: #{tpu_custom_call.1} parent=0 // pred_check_branch
    %497 = sbr.rel (0) target = $region309
  $region308: #{tpu_custom_call.1} parent=0 // pred_region
    %498 = vsyncadd %s74, 16
  $region309: #{tpu_custom_call.1} parent=0 // pred_fallthru
    _
  %s499 = sadd.s32 %s25, 5
  %s500 = sld [smem:[#allocation6 + %s499]]
  %s501 = sld [smem:[#allocation7 + %s499]]
  %s502 = scalar_lea.vmem %s2, %s500
  %s503 = scalar_lea.vmem [#allocation2], 5
  %p505 = scmp.lt.u32.totalorder 1, 8
  %p506 = pneg %p505
  // Predicated region
  $region310: #{tpu_custom_call.1} parent=0 // pred_check
    _
  $region311: #{tpu_custom_call.1} parent=0 // pred_check_branch
    %508 = sbr.rel (%p505) target = $region313
  $region312: #{tpu_custom_call.1} parent=0 // pred_region
    %s523 = sand.u32 1, 7
    %p524 = scmp.eq.s32.totalorder %s523, 0
    %p525 = pneg %p524
    // Predicated region
    $region325: #{tpu_custom_call.1} parent=312 // pred_check
      _
    $region326: #{tpu_custom_call.1} parent=312 // pred_check_branch
      %527 = sbr.rel (%p524) target = $region328
    $region327: #{tpu_custom_call.1} parent=312 // pred_region
      %s528 = sand.u32 1, 7
      %s529 = ssub.s32 1, %s528
      %s530 = scalar_lea.vmem %s502, %s529
      %s531 = ssub.s32 1, %s528
      %s532 = scalar_lea.vmem %s503, %s531 [#allocation2]
      %s533 = sshllo.u32 0, %s528
      loop: start=0, step=1, limit=1
      $region329: #{tpu_custom_call.1} parent=327 // loop_pre_header
        _
      $region330: #{tpu_custom_call.1} parent=327 // loop_header
        %s535 = sphi 0, %s539
        %p536 = scmp.ge.s32.totalorder %s535, 1
        %s540 = sphi %s530, %s530
        %s541 = sphi %s532, %s532
      $region331: #{tpu_custom_call.1} parent=327 // loop_header_branch
        %538 = sbr.rel (%p536) target = $region335
      $region332: #{tpu_custom_call.1} parent=327 // loop_body
        %v542 = vld [vmem:[%s540] sm:%s533]
        %543 = vst [vmem:[%s541] sm:%s533] %v542
      $region333: #{tpu_custom_call.1} parent=327 // loop_footer
        %s539 = sadd.s32 1, %s535
      $region334: #{tpu_custom_call.1} parent=327 // loop_footer_branch
        %534 = sbr.rel target = $region330
      $region335: #{tpu_custom_call.1} parent=327 // loop_exit
        _
    $region328: #{tpu_custom_call.1} parent=312 // pred_fallthru
      _
  $region313: #{tpu_custom_call.1} parent=0 // pred_fallthru
    _
  // Predicated region
  $region314: #{tpu_custom_call.1} parent=0 // pred_check
    %p509 = pneg %p505
  $region315: #{tpu_custom_call.1} parent=0 // pred_check_branch
    %511 = sbr.rel (%p509) target = $region317
  $region316: #{tpu_custom_call.1} parent=0 // pred_region
    %s512 = sshllo.u32 0, 1
    loop: start=0, step=1, limit=1
    $region318: #{tpu_custom_call.1} parent=316 // loop_pre_header
      _
    $region319: #{tpu_custom_call.1} parent=316 // loop_header
      %s514 = sphi 0, %s518
      %p515 = scmp.ge.s32.totalorder %s514, 1
      %s519 = sphi %s502, %s502
      %s520 = sphi %s503, %s503
    $region320: #{tpu_custom_call.1} parent=316 // loop_header_branch
      %517 = sbr.rel (%p515) target = $region324
    $region321: #{tpu_custom_call.1} parent=316 // loop_body
      %v521 = vld [vmem:[%s519] sm:%s512]
      %522 = vst [vmem:[%s520] sm:%s512] %v521
    $region322: #{tpu_custom_call.1} parent=316 // loop_footer
      %s518 = sadd.s32 1, %s514
    $region323: #{tpu_custom_call.1} parent=316 // loop_footer_branch
      %513 = sbr.rel target = $region319
    $region324: #{tpu_custom_call.1} parent=316 // loop_exit
      _
  $region317: #{tpu_custom_call.1} parent=0 // pred_fallthru
    _
  // Predicated region
  $region336: #{tpu_custom_call.1} parent=0 // pred_check
    _
  $region337: #{tpu_custom_call.1} parent=0 // pred_check_branch
    %546 = sbr.rel (0) target = $region339
  $region338: #{tpu_custom_call.1} parent=0 // pred_region
    %547 = vsyncadd [#allocation4], 16
  $region339: #{tpu_custom_call.1} parent=0 // pred_fallthru
    _
  %s548 = scalar_lea.vmem %s3, %s501
  %s549 = scalar_lea.vmem [#allocation3], 5
  %p551 = scmp.lt.u32.totalorder 1, 8
  %p552 = pneg %p551
  // Predicated region
  $region340: #{tpu_custom_call.1} parent=0 // pred_check
    _
  $region341: #{tpu_custom_call.1} parent=0 // pred_check_branch
    %554 = sbr.rel (%p551) target = $region343
  $region342: #{tpu_custom_call.1} parent=0 // pred_region
    %s569 = sand.u32 1, 7
    %p570 = scmp.eq.s32.totalorder %s569, 0
    %p571 = pneg %p570
    // Predicated region
    $region355: #{tpu_custom_call.1} parent=342 // pred_check
      _
    $region356: #{tpu_custom_call.1} parent=342 // pred_check_branch
      %573 = sbr.rel (%p570) target = $region358
    $region357: #{tpu_custom_call.1} parent=342 // pred_region
      %s574 = sand.u32 1, 7
      %s575 = ssub.s32 1, %s574
      %s576 = scalar_lea.vmem %s548, %s575
      %s577 = ssub.s32 1, %s574
      %s578 = scalar_lea.vmem %s549, %s577 [#allocation3]
      %s579 = sshllo.u32 0, %s574
      loop: start=0, step=1, limit=1
      $region359: #{tpu_custom_call.1} parent=357 // loop_pre_header
        _
      $region360: #{tpu_custom_call.1} parent=357 // loop_header
        %s581 = sphi 0, %s585
        %p582 = scmp.ge.s32.totalorder %s581, 1
        %s586 = sphi %s576, %s576
        %s587 = sphi %s578, %s578
      $region361: #{tpu_custom_call.1} parent=357 // loop_header_branch
        %584 = sbr.rel (%p582) target = $region365
      $region362: #{tpu_custom_call.1} parent=357 // loop_body
        %v588 = vld [vmem:[%s586] sm:%s579]
        %589 = vst [vmem:[%s587] sm:%s579] %v588
      $region363: #{tpu_custom_call.1} parent=357 // loop_footer
        %s585 = sadd.s32 1, %s581
      $region364: #{tpu_custom_call.1} parent=357 // loop_footer_branch
        %580 = sbr.rel target = $region360
      $region365: #{tpu_custom_call.1} parent=357 // loop_exit
        _
    $region358: #{tpu_custom_call.1} parent=342 // pred_fallthru
      _
  $region343: #{tpu_custom_call.1} parent=0 // pred_fallthru
    _
  // Predicated region
  $region344: #{tpu_custom_call.1} parent=0 // pred_check
    %p555 = pneg %p551
  $region345: #{tpu_custom_call.1} parent=0 // pred_check_branch
    %557 = sbr.rel (%p555) target = $region347
  $region346: #{tpu_custom_call.1} parent=0 // pred_region
    %s558 = sshllo.u32 0, 1
    loop: start=0, step=1, limit=1
    $region348: #{tpu_custom_call.1} parent=346 // loop_pre_header
      _
    $region349: #{tpu_custom_call.1} parent=346 // loop_header
      %s560 = sphi 0, %s564
      %p561 = scmp.ge.s32.totalorder %s560, 1
      %s565 = sphi %s548, %s548
      %s566 = sphi %s549, %s549
    $region350: #{tpu_custom_call.1} parent=346 // loop_header_branch
      %563 = sbr.rel (%p561) target = $region354
    $region351: #{tpu_custom_call.1} parent=346 // loop_body
      %v567 = vld [vmem:[%s565] sm:%s558]
      %568 = vst [vmem:[%s566] sm:%s558] %v567
    $region352: #{tpu_custom_call.1} parent=346 // loop_footer
      %s564 = sadd.s32 1, %s560
    $region353: #{tpu_custom_call.1} parent=346 // loop_footer_branch
      %559 = sbr.rel target = $region349
    $region354: #{tpu_custom_call.1} parent=346 // loop_exit
      _
  $region347: #{tpu_custom_call.1} parent=0 // pred_fallthru
    _
  // Predicated region
  $region366: #{tpu_custom_call.1} parent=0 // pred_check
    _
  $region367: #{tpu_custom_call.1} parent=0 // pred_check_branch
    %592 = sbr.rel (0) target = $region369
  $region368: #{tpu_custom_call.1} parent=0 // pred_region
    %593 = vsyncadd %s74, 16
  $region369: #{tpu_custom_call.1} parent=0 // pred_fallthru
    _
  %s594 = sadd.s32 %s25, 6
  %s595 = sld [smem:[#allocation6 + %s594]]
  %s596 = sld [smem:[#allocation7 + %s594]]
  %s597 = scalar_lea.vmem %s2, %s595
  %s598 = scalar_lea.vmem [#allocation2], 6
  %p600 = scmp.lt.u32.totalorder 1, 8
  %p601 = pneg %p600
  // Predicated region
  $region370: #{tpu_custom_call.1} parent=0 // pred_check
    _
  $region371: #{tpu_custom_call.1} parent=0 // pred_check_branch
    %603 = sbr.rel (%p600) target = $region373
  $region372: #{tpu_custom_call.1} parent=0 // pred_region
    %s618 = sand.u32 1, 7
    %p619 = scmp.eq.s32.totalorder %s618, 0
    %p620 = pneg %p619
    // Predicated region
    $region385: #{tpu_custom_call.1} parent=372 // pred_check
      _
    $region386: #{tpu_custom_call.1} parent=372 // pred_check_branch
      %622 = sbr.rel (%p619) target = $region388
    $region387: #{tpu_custom_call.1} parent=372 // pred_region
      %s623 = sand.u32 1, 7
      %s624 = ssub.s32 1, %s623
      %s625 = scalar_lea.vmem %s597, %s624
      %s626 = ssub.s32 1, %s623
      %s627 = scalar_lea.vmem %s598, %s626 [#allocation2]
      %s628 = sshllo.u32 0, %s623
      loop: start=0, step=1, limit=1
      $region389: #{tpu_custom_call.1} parent=387 // loop_pre_header
        _
      $region390: #{tpu_custom_call.1} parent=387 // loop_header
        %s630 = sphi 0, %s634
        %p631 = scmp.ge.s32.totalorder %s630, 1
        %s635 = sphi %s625, %s625
        %s636 = sphi %s627, %s627
      $region391: #{tpu_custom_call.1} parent=387 // loop_header_branch
        %633 = sbr.rel (%p631) target = $region395
      $region392: #{tpu_custom_call.1} parent=387 // loop_body
        %v637 = vld [vmem:[%s635] sm:%s628]
        %638 = vst [vmem:[%s636] sm:%s628] %v637
      $region393: #{tpu_custom_call.1} parent=387 // loop_footer
        %s634 = sadd.s32 1, %s630
      $region394: #{tpu_custom_call.1} parent=387 // loop_footer_branch
        %629 = sbr.rel target = $region390
      $region395: #{tpu_custom_call.1} parent=387 // loop_exit
        _
    $region388: #{tpu_custom_call.1} parent=372 // pred_fallthru
      _
  $region373: #{tpu_custom_call.1} parent=0 // pred_fallthru
    _
  // Predicated region
  $region374: #{tpu_custom_call.1} parent=0 // pred_check
    %p604 = pneg %p600
  $region375: #{tpu_custom_call.1} parent=0 // pred_check_branch
    %606 = sbr.rel (%p604) target = $region377
  $region376: #{tpu_custom_call.1} parent=0 // pred_region
    %s607 = sshllo.u32 0, 1
    loop: start=0, step=1, limit=1
    $region378: #{tpu_custom_call.1} parent=376 // loop_pre_header
      _
    $region379: #{tpu_custom_call.1} parent=376 // loop_header
      %s609 = sphi 0, %s613
      %p610 = scmp.ge.s32.totalorder %s609, 1
      %s614 = sphi %s597, %s597
      %s615 = sphi %s598, %s598
    $region380: #{tpu_custom_call.1} parent=376 // loop_header_branch
      %612 = sbr.rel (%p610) target = $region384
    $region381: #{tpu_custom_call.1} parent=376 // loop_body
      %v616 = vld [vmem:[%s614] sm:%s607]
      %617 = vst [vmem:[%s615] sm:%s607] %v616
    $region382: #{tpu_custom_call.1} parent=376 // loop_footer
      %s613 = sadd.s32 1, %s609
    $region383: #{tpu_custom_call.1} parent=376 // loop_footer_branch
      %608 = sbr.rel target = $region379
    $region384: #{tpu_custom_call.1} parent=376 // loop_exit
      _
  $region377: #{tpu_custom_call.1} parent=0 // pred_fallthru
    _
  // Predicated region
  $region396: #{tpu_custom_call.1} parent=0 // pred_check
    _
  $region397: #{tpu_custom_call.1} parent=0 // pred_check_branch
    %641 = sbr.rel (0) target = $region399
  $region398: #{tpu_custom_call.1} parent=0 // pred_region
    %642 = vsyncadd [#allocation4], 16
  $region399: #{tpu_custom_call.1} parent=0 // pred_fallthru
    _
  %s643 = scalar_lea.vmem %s3, %s596
  %s644 = scalar_lea.vmem [#allocation3], 6
  %p646 = scmp.lt.u32.totalorder 1, 8
  %p647 = pneg %p646
  // Predicated region
  $region400: #{tpu_custom_call.1} parent=0 // pred_check
    _
  $region401: #{tpu_custom_call.1} parent=0 // pred_check_branch
    %649 = sbr.rel (%p646) target = $region403
  $region402: #{tpu_custom_call.1} parent=0 // pred_region
    %s664 = sand.u32 1, 7
    %p665 = scmp.eq.s32.totalorder %s664, 0
    %p666 = pneg %p665
    // Predicated region
    $region415: #{tpu_custom_call.1} parent=402 // pred_check
      _
    $region416: #{tpu_custom_call.1} parent=402 // pred_check_branch
      %668 = sbr.rel (%p665) target = $region418
    $region417: #{tpu_custom_call.1} parent=402 // pred_region
      %s669 = sand.u32 1, 7
      %s670 = ssub.s32 1, %s669
      %s671 = scalar_lea.vmem %s643, %s670
      %s672 = ssub.s32 1, %s669
      %s673 = scalar_lea.vmem %s644, %s672 [#allocation3]
      %s674 = sshllo.u32 0, %s669
      loop: start=0, step=1, limit=1
      $region419: #{tpu_custom_call.1} parent=417 // loop_pre_header
        _
      $region420: #{tpu_custom_call.1} parent=417 // loop_header
        %s676 = sphi 0, %s680
        %p677 = scmp.ge.s32.totalorder %s676, 1
        %s681 = sphi %s671, %s671
        %s682 = sphi %s673, %s673
      $region421: #{tpu_custom_call.1} parent=417 // loop_header_branch
        %679 = sbr.rel (%p677) target = $region425
      $region422: #{tpu_custom_call.1} parent=417 // loop_body
        %v683 = vld [vmem:[%s681] sm:%s674]
        %684 = vst [vmem:[%s682] sm:%s674] %v683
      $region423: #{tpu_custom_call.1} parent=417 // loop_footer
        %s680 = sadd.s32 1, %s676
      $region424: #{tpu_custom_call.1} parent=417 // loop_footer_branch
        %675 = sbr.rel target = $region420
      $region425: #{tpu_custom_call.1} parent=417 // loop_exit
        _
    $region418: #{tpu_custom_call.1} parent=402 // pred_fallthru
      _
  $region403: #{tpu_custom_call.1} parent=0 // pred_fallthru
    _
  // Predicated region
  $region404: #{tpu_custom_call.1} parent=0 // pred_check
    %p650 = pneg %p646
  $region405: #{tpu_custom_call.1} parent=0 // pred_check_branch
    %652 = sbr.rel (%p650) target = $region407
  $region406: #{tpu_custom_call.1} parent=0 // pred_region
    %s653 = sshllo.u32 0, 1
    loop: start=0, step=1, limit=1
    $region408: #{tpu_custom_call.1} parent=406 // loop_pre_header
      _
    $region409: #{tpu_custom_call.1} parent=406 // loop_header
      %s655 = sphi 0, %s659
      %p656 = scmp.ge.s32.totalorder %s655, 1
      %s660 = sphi %s643, %s643
      %s661 = sphi %s644, %s644
    $region410: #{tpu_custom_call.1} parent=406 // loop_header_branch
      %658 = sbr.rel (%p656) target = $region414
    $region411: #{tpu_custom_call.1} parent=406 // loop_body
      %v662 = vld [vmem:[%s660] sm:%s653]
      %663 = vst [vmem:[%s661] sm:%s653] %v662
    $region412: #{tpu_custom_call.1} parent=406 // loop_footer
      %s659 = sadd.s32 1, %s655
    $region413: #{tpu_custom_call.1} parent=406 // loop_footer_branch
      %654 = sbr.rel target = $region409
    $region414: #{tpu_custom_call.1} parent=406 // loop_exit
      _
  $region407: #{tpu_custom_call.1} parent=0 // pred_fallthru
    _
  // Predicated region
  $region426: #{tpu_custom_call.1} parent=0 // pred_check
    _
  $region427: #{tpu_custom_call.1} parent=0 // pred_check_branch
    %687 = sbr.rel (0) target = $region429
  $region428: #{tpu_custom_call.1} parent=0 // pred_region
    %688 = vsyncadd %s74, 16
  $region429: #{tpu_custom_call.1} parent=0 // pred_fallthru
    _
  %s689 = sadd.s32 %s25, 7
  %s690 = sld [smem:[#allocation6 + %s689]]
  %s691 = sld [smem:[#allocation7 + %s689]]
  %s692 = scalar_lea.vmem %s2, %s690
  %s693 = scalar_lea.vmem [#allocation2], 7
  %p695 = scmp.lt.u32.totalorder 1, 8
  %p696 = pneg %p695
  // Predicated region
  $region430: #{tpu_custom_call.1} parent=0 // pred_check
    _
  $region431: #{tpu_custom_call.1} parent=0 // pred_check_branch
    %698 = sbr.rel (%p695) target = $region433
  $region432: #{tpu_custom_call.1} parent=0 // pred_region
    %s713 = sand.u32 1, 7
    %p714 = scmp.eq.s32.totalorder %s713, 0
    %p715 = pneg %p714
    // Predicated region
    $region445: #{tpu_custom_call.1} parent=432 // pred_check
      _
    $region446: #{tpu_custom_call.1} parent=432 // pred_check_branch
      %717 = sbr.rel (%p714) target = $region448
    $region447: #{tpu_custom_call.1} parent=432 // pred_region
      %s718 = sand.u32 1, 7
      %s719 = ssub.s32 1, %s718
      %s720 = scalar_lea.vmem %s692, %s719
      %s721 = ssub.s32 1, %s718
      %s722 = scalar_lea.vmem %s693, %s721 [#allocation2]
      %s723 = sshllo.u32 0, %s718
      loop: start=0, step=1, limit=1
      $region449: #{tpu_custom_call.1} parent=447 // loop_pre_header
        _
      $region450: #{tpu_custom_call.1} parent=447 // loop_header
        %s725 = sphi 0, %s729
        %p726 = scmp.ge.s32.totalorder %s725, 1
        %s730 = sphi %s720, %s720
        %s731 = sphi %s722, %s722
      $region451: #{tpu_custom_call.1} parent=447 // loop_header_branch
        %728 = sbr.rel (%p726) target = $region455
      $region452: #{tpu_custom_call.1} parent=447 // loop_body
        %v732 = vld [vmem:[%s730] sm:%s723]
        %733 = vst [vmem:[%s731] sm:%s723] %v732
      $region453: #{tpu_custom_call.1} parent=447 // loop_footer
        %s729 = sadd.s32 1, %s725
      $region454: #{tpu_custom_call.1} parent=447 // loop_footer_branch
        %724 = sbr.rel target = $region450
      $region455: #{tpu_custom_call.1} parent=447 // loop_exit
        _
    $region448: #{tpu_custom_call.1} parent=432 // pred_fallthru
      _
  $region433: #{tpu_custom_call.1} parent=0 // pred_fallthru
    _
  // Predicated region
  $region434: #{tpu_custom_call.1} parent=0 // pred_check
    %p699 = pneg %p695
  $region435: #{tpu_custom_call.1} parent=0 // pred_check_branch
    %701 = sbr.rel (%p699) target = $region437
  $region436: #{tpu_custom_call.1} parent=0 // pred_region
    %s702 = sshllo.u32 0, 1
    loop: start=0, step=1, limit=1
    $region438: #{tpu_custom_call.1} parent=436 // loop_pre_header
      _
    $region439: #{tpu_custom_call.1} parent=436 // loop_header
      %s704 = sphi 0, %s708
      %p705 = scmp.ge.s32.totalorder %s704, 1
      %s709 = sphi %s692, %s692
      %s710 = sphi %s693, %s693
    $region440: #{tpu_custom_call.1} parent=436 // loop_header_branch
      %707 = sbr.rel (%p705) target = $region444
    $region441: #{tpu_custom_call.1} parent=436 // loop_body
      %v711 = vld [vmem:[%s709] sm:%s702]
      %712 = vst [vmem:[%s710] sm:%s702] %v711
    $region442: #{tpu_custom_call.1} parent=436 // loop_footer
      %s708 = sadd.s32 1, %s704
    $region443: #{tpu_custom_call.1} parent=436 // loop_footer_branch
      %703 = sbr.rel target = $region439
    $region444: #{tpu_custom_call.1} parent=436 // loop_exit
      _
  $region437: #{tpu_custom_call.1} parent=0 // pred_fallthru
    _
  // Predicated region
  $region456: #{tpu_custom_call.1} parent=0 // pred_check
    _
  $region457: #{tpu_custom_call.1} parent=0 // pred_check_branch
    %736 = sbr.rel (0) target = $region459
  $region458: #{tpu_custom_call.1} parent=0 // pred_region
    %737 = vsyncadd [#allocation4], 16
  $region459: #{tpu_custom_call.1} parent=0 // pred_fallthru
    _
  %s738 = scalar_lea.vmem %s3, %s691
  %s739 = scalar_lea.vmem [#allocation3], 7
  %p741 = scmp.lt.u32.totalorder 1, 8
  %p742 = pneg %p741
  // Predicated region
  $region460: #{tpu_custom_call.1} parent=0 // pred_check
    _
  $region461: #{tpu_custom_call.1} parent=0 // pred_check_branch
    %744 = sbr.rel (%p741) target = $region463
  $region462: #{tpu_custom_call.1} parent=0 // pred_region
    %s759 = sand.u32 1, 7
    %p760 = scmp.eq.s32.totalorder %s759, 0
    %p761 = pneg %p760
    // Predicated region
    $region475: #{tpu_custom_call.1} parent=462 // pred_check
      _
    $region476: #{tpu_custom_call.1} parent=462 // pred_check_branch
      %763 = sbr.rel (%p760) target = $region478
    $region477: #{tpu_custom_call.1} parent=462 // pred_region
      %s764 = sand.u32 1, 7
      %s765 = ssub.s32 1, %s764
      %s766 = scalar_lea.vmem %s738, %s765
      %s767 = ssub.s32 1, %s764
      %s768 = scalar_lea.vmem %s739, %s767 [#allocation3]
      %s769 = sshllo.u32 0, %s764
      loop: start=0, step=1, limit=1
      $region479: #{tpu_custom_call.1} parent=477 // loop_pre_header
        _
      $region480: #{tpu_custom_call.1} parent=477 // loop_header
        %s771 = sphi 0, %s775
        %p772 = scmp.ge.s32.totalorder %s771, 1
        %s776 = sphi %s766, %s766
        %s777 = sphi %s768, %s768
      $region481: #{tpu_custom_call.1} parent=477 // loop_header_branch
        %774 = sbr.rel (%p772) target = $region485
      $region482: #{tpu_custom_call.1} parent=477 // loop_body
        %v778 = vld [vmem:[%s776] sm:%s769]
        %779 = vst [vmem:[%s777] sm:%s769] %v778
      $region483: #{tpu_custom_call.1} parent=477 // loop_footer
        %s775 = sadd.s32 1, %s771
      $region484: #{tpu_custom_call.1} parent=477 // loop_footer_branch
        %770 = sbr.rel target = $region480
      $region485: #{tpu_custom_call.1} parent=477 // loop_exit
        _
    $region478: #{tpu_custom_call.1} parent=462 // pred_fallthru
      _
  $region463: #{tpu_custom_call.1} parent=0 // pred_fallthru
    _
  // Predicated region
  $region464: #{tpu_custom_call.1} parent=0 // pred_check
    %p745 = pneg %p741
  $region465: #{tpu_custom_call.1} parent=0 // pred_check_branch
    %747 = sbr.rel (%p745) target = $region467
  $region466: #{tpu_custom_call.1} parent=0 // pred_region
    %s748 = sshllo.u32 0, 1
    loop: start=0, step=1, limit=1
    $region468: #{tpu_custom_call.1} parent=466 // loop_pre_header
      _
    $region469: #{tpu_custom_call.1} parent=466 // loop_header
      %s750 = sphi 0, %s754
      %p751 = scmp.ge.s32.totalorder %s750, 1
      %s755 = sphi %s738, %s738
      %s756 = sphi %s739, %s739
    $region470: #{tpu_custom_call.1} parent=466 // loop_header_branch
      %753 = sbr.rel (%p751) target = $region474
    $region471: #{tpu_custom_call.1} parent=466 // loop_body
      %v757 = vld [vmem:[%s755] sm:%s748]
      %758 = vst [vmem:[%s756] sm:%s748] %v757
    $region472: #{tpu_custom_call.1} parent=466 // loop_footer
      %s754 = sadd.s32 1, %s750
    $region473: #{tpu_custom_call.1} parent=466 // loop_footer_branch
      %749 = sbr.rel target = $region469
    $region474: #{tpu_custom_call.1} parent=466 // loop_exit
      _
  $region467: #{tpu_custom_call.1} parent=0 // pred_fallthru
    _
  // Predicated region
  $region486: #{tpu_custom_call.1} parent=0 // pred_check
    _
  $region487: #{tpu_custom_call.1} parent=0 // pred_check_branch
    %782 = sbr.rel (0) target = $region489
  $region488: #{tpu_custom_call.1} parent=0 // pred_region
    %783 = vsyncadd %s74, 16
  $region489: #{tpu_custom_call.1} parent=0 // pred_fallthru
    _
  %s784 = smul.u32 1, 1
  %s785 = sshll.u32 %s784, 4
  %786 = dma.done [#allocation4], %s785
  %s787 = sshll.u32 %s784, 4
  %788 = dma.done %s74, %s787
  %s789 = sshll.u32 %s784, 4
  %790 = dma.done [#allocation4], %s789
  %s791 = sshll.u32 %s784, 4
  %792 = dma.done %s74, %s791
  %s793 = sshll.u32 %s784, 4
  %794 = dma.done [#allocation4], %s793
  %s795 = sshll.u32 %s784, 4
  %796 = dma.done %s74, %s795
  %s797 = sshll.u32 %s784, 4
  %798 = dma.done [#allocation4], %s797
  %s799 = sshll.u32 %s784, 4
  %800 = dma.done %s74, %s799
  %s801 = sshll.u32 %s784, 4
  %802 = dma.done [#allocation4], %s801
  %s803 = sshll.u32 %s784, 4
  %804 = dma.done %s74, %s803
  %s805 = sshll.u32 %s784, 4
  %806 = dma.done [#allocation4], %s805
  %s807 = sshll.u32 %s784, 4
  %808 = dma.done %s74, %s807
  %s809 = sshll.u32 %s784, 4
  %810 = dma.done [#allocation4], %s809
  %s811 = sshll.u32 %s784, 4
  %812 = dma.done %s74, %s811
  %s813 = sshll.u32 %s784, 4
  %814 = dma.done [#allocation4], %s813
  %s815 = sshll.u32 %s784, 4
  %816 = dma.done %s74, %s815
  %v817 = vld [vmem:[#allocation2] sm:$0xff]
  %v818 = vld [vmem:[#allocation3] sm:$0xff]
  %820 = vrot.lane.b32.xlu0 %v818, 64
  %v821 = vpop.permute.xlu0 %820
  %vm823 = vcmask 523264
  %v824 = vsel %vm823, %v817, %v821
  %v825 = vld [vmem:[%s4] sm:$0xff]
  %v826 = vld [vmem:[%s4 + $0x8] sm:$0xff]
  %v827 = vld [vmem:[%s4 + $0x10] sm:$0xff]
  %v828 = vld [vmem:[%s4 + $0x18] sm:$0xff]
  %v829 = vld [vmem:[%s4 + $0x20] sm:$0xff]
  %v830 = vld [vmem:[%s4 + $0x28] sm:$0xff]
  %v831 = vld [vmem:[%s4 + $0x30] sm:$0xff]
  %v832 = vld [vmem:[%s4 + $0x38] sm:$0xff]
  %v833 = vld [vmem:[%s4 + $0x40] sm:$0xff]
  %v834 = vld [vmem:[%s4 + $0x48] sm:$0xff]
  %v835 = vld [vmem:[%s4 + $0x50] sm:$0xff]
  %v836 = vld [vmem:[%s4 + $0x58] sm:$0xff]
  %v837 = vld [vmem:[%s4 + $0x60] sm:$0xff]
  %v838 = vld [vmem:[%s4 + $0x68] sm:$0xff]
  %v839 = vld [vmem:[%s4 + $0x70] sm:$0xff]
  %v840 = vld [vmem:[%s4 + $0x78] sm:$0xff]
  %v841 = vld [vmem:[%s5] sm:$0x1]
  %v843 = vlaneseq
  %v844 = vshrl.u32 %v843, 7
  %v845 = vsub.s32 0, %v844
  %v846 = vrot.slane %v841, %v845
  %848 = vmatprep.subr.mxu0 0.0
  %849 = vmatpush1.msra.mxu0 %v825
  %850 = vmatprep.subr.mxu0 0.0
  %851 = vmatpush1.msra.mxu0 %v826
  %852 = vmatprep.subr.mxu0 0.0
  %853 = vmatpush1.msra.mxu0 %v827
  %854 = vmatprep.subr.mxu0 0.0
  %855 = vmatpush1.msra.mxu0 %v828
  %856 = vmatprep.subr.mxu0 0.0
  %857 = vmatpush1.msra.mxu0 %v829
  %858 = vmatprep.subr.mxu0 0.0
  %859 = vmatpush1.msra.mxu0 %v830
  %860 = vmatprep.subr.mxu0 0.0
  %861 = vmatpush1.msra.mxu0 %v831
  %862 = vmatprep.subr.mxu0 0.0
  %863 = vmatpush1.msra.mxu0 %v832
  %864 = vmatprep.subr.mxu0 0.0
  %865 = vmatpush1.msra.mxu0 %v833
  %866 = vmatprep.subr.mxu0 0.0
  %867 = vmatpush1.msra.mxu0 %v834
  %868 = vmatprep.subr.mxu0 0.0
  %869 = vmatpush1.msra.mxu0 %v835
  %870 = vmatprep.subr.mxu0 0.0
  %871 = vmatpush1.msra.mxu0 %v836
  %872 = vmatprep.subr.mxu0 0.0
  %873 = vmatpush1.msra.mxu0 %v837
  %874 = vmatprep.subr.mxu0 0.0
  %875 = vmatpush1.msra.mxu0 %v838
  %876 = vmatprep.subr.mxu0 0.0
  %877 = vmatpush1.msra.mxu0 %v839
  %878 = vmatprep.subr.mxu0 0.0
  %879 = vmatpush1.msra.mxu0 %v840
  %880 = vmatprep.subr.mxu0 0.0
  %881 = vmatpush1.msra.mxu0 0.0
  %882 = vmatprep.subr.mxu0 0.0
  %883 = vmatpush1.msra.mxu0 0.0
  %884 = vmatprep.subr.mxu0 0.0
  %885 = vmatpush1.msra.mxu0 0.0
  %886 = vmatprep.subr.mxu0 0.0
  %887 = vmatpush1.msra.mxu0 0.0
  %888 = vmatprep.subr.mxu0 0.0
  %889 = vmatpush1.msra.mxu0 0.0
  %890 = vmatprep.subr.mxu0 0.0
  %891 = vmatpush1.msra.mxu0 0.0
  %892 = vmatprep.subr.mxu0 0.0
  %893 = vmatpush1.msra.mxu0 0.0
  %894 = vmatprep.subr.mxu0 0.0
  %895 = vmatpush1.msra.mxu0 0.0
  %896 = vmatprep.subr.mxu0 0.0
  %897 = vmatpush1.msra.mxu0 0.0
  %898 = vmatprep.subr.mxu0 0.0
  %899 = vmatpush1.msra.mxu0 0.0
  %900 = vmatprep.subr.mxu0 0.0
  %901 = vmatpush1.msra.mxu0 0.0
  %902 = vmatprep.subr.mxu0 0.0
  %903 = vmatpush1.msra.mxu0 0.0
  %904 = vmatprep.subr.mxu0 0.0
  %905 = vmatpush1.msra.mxu0 0.0
  %906 = vmatprep.subr.mxu0 0.0
  %907 = vmatpush1.msra.mxu0 0.0
  %908 = vmatprep.subr.mxu0 0.0
  %909 = vmatpush1.msra.mxu0 0.0
  %910 = vmatprep.subr.mxu0 0.0
  %911 = vmatpush1.msra.mxu0 0.0
  %912 = vmatprep.mubr.f32.mxu0 0.0
  %913 = vmatmul.mubr.f32.gmra.mrb[0].mxu0 %v824
  %v914 = vpop.f32.mrb[0].mxu0
  %v915 = vadd.f32 %v846, %v914
  %v916 = vpop.f32.mrb[0].mxu0
  %917 = vdwg.mxu0
  %919 = vrot.lane.b32.xlu0 %v915, 1
  %v920 = vpop.permute.xlu0 %919
  %v922 = vsub.f32 %v915, %v920
  %v923 = vmul.f32 %v922, 1.442695
  %v924 = vpow.pop %v923
  %v925 = vadd.f32 %v924, 1.0
  %v926 = vrcp.pop %v925
  %v927 = vmul.f32 1.0, %v926
  %v928 = vsub.f32 1.0, %v927
  %930 = vrot.lane.b32.xlu0 %v927, 127
  %v931 = vpop.permute.xlu0 %930
  %vm933 = vcmask 7168
  %v934 = vsel %vm933, %v931, %v928
  %vm935 = vcmask 15360
  %936 = vst.msk [vmem:[%s6] sm:$0xff] %vm935, %v934
  // Predicated region
  $region490: #{tpu_custom_call.1} parent=0 // pred_check
    _
  $region491: #{tpu_custom_call.1} parent=0 // pred_check_branch
    %938 = sbr.rel (0) target = $region493
  $region492: #{tpu_custom_call.1} parent=0 // pred_region
    _
  $region493: #{tpu_custom_call.1} parent=0 // pred_fallthru
    _
  // Predicated region
  $region494: #{tpu_custom_call.1} parent=0 // pred_check
    _
  $region495: #{tpu_custom_call.1} parent=0 // pred_check_branch
    %940 = sbr.rel (0) target = $region497
  $region496: #{tpu_custom_call.1} parent=0 // pred_region
    _
  $region497: #{tpu_custom_call.1} parent=0 // pred_fallthru
    _
  %941 = vsyncmov [#allocation4]
  %s942 = vpop.sfrf %941
  %p943 = scmp.eq.s32.totalorder %s942, 0
  %p944 = pneg %p943
  %946 = shalt.err (%p944)
  %s947 = scalar_lea.sflag [#allocation4], 1
  %948 = vsyncmov %s947
  %s949 = vpop.sfrf %948
  %p950 = scmp.eq.s32.totalorder %s949, 0
  %p951 = pneg %p950
  %953 = shalt.err (%p951)

</llo_original>
